<compile_context>
chip_gen: v7x
topology: tpu7x:2x2x1
jax: 0.10.0
libtpu: 0.0.40
codegen_flags: <defaults>
</compile_context>

<pallas_src>
import functools

import jax
import jax.numpy as jnp
from jax.experimental import pallas as pl
from jax.experimental.pallas import tpu as pltpu

LEAKY_SLOPE = 0.01            # nn.LeakyReLU / F.leaky_relu default
GN_EPS = 1e-5                 # nn.GroupNorm default eps
_MM_DTYPE = jnp.bfloat16      # MXU-operand / inter-layer activation dtype
                              # (f32 accumulate).  Set jnp.float32 for parity.
_VMEM_LIMIT_BYTES = 48 * 1024 * 1024   # safe on v7x (64 MiB); raise toward
                                       # 96 MiB on v5e/v6e (128 MiB physical).


def find_group_number(channels, min_group_channels=4, max_group_channels=32):
    for num_groups in range(channels, 0, -1):
        gc = channels // num_groups
        if channels % num_groups == 0 and gc >= min_group_channels and gc <= max_group_channels:
            return num_groups
    return 1


# ---------------------------------------------------------------------------
# Wrapper-side helpers (tiny, trace-time ops).
# ---------------------------------------------------------------------------
def _pad_flat(x4d, dtype):
    """(B, C, H, W) -> (B, C, H*W + 2W + 2): flat pixels, W+1 zeros front/back.

    Tap (ky, kx) of a 3x3 / pad-1 conv is then the contiguous slice
    [ky*W + kx : ky*W + kx + H*W].  Vertically out-of-range reads land in the
    zero pad; horizontal row-crossings are removed with the column masks below.
    """
    B, C, H, W = x4d.shape
    xf = x4d.astype(dtype).reshape(B, C, H * W)
    return jnp.pad(xf, ((0, 0), (0, 0), (W + 1, W + 1)))


def _boundary_masks(H, W, dtype):
    """(2, H*W): row 0 zeroes x==0 (dx=-1 taps), row 1 zeroes x==W-1 (dx=+1)."""
    col = jnp.arange(H * W, dtype=jnp.int32) % W
    left = (col != 0).astype(dtype)
    right = (col != W - 1).astype(dtype)
    return jnp.stack([left, right], axis=0)


# ---------------------------------------------------------------------------
# Kernel 1: attention block, one grid step per sample ("parallel" over B).
#   conditioning conv3x3 (9 tap dots) -> GroupNorm -> LeakyReLU -> spatial mean
#   -> MLP (+ precomputed GAP of x) -> temperature softmax over K.
# ---------------------------------------------------------------------------
def _attention_kernel(temp_inv_ref, npf_ref, masks_ref, cw_ref, cb_ref,
                      gamma_ref, beta_ref, gmat_ref, gp_ref, w1_ref, b1_ref,
                      w2_ref, b2_ref, scores_ref, *, H, W, inv_n):
    HW = H * W
    bu = cb_ref.shape[0]
    m_left = masks_ref[0:1, :]
    m_right = masks_ref[1:2, :]

    # Conditioning conv: 9 accumulating dots on shifted views of the padded-flat
    # noise map (no im2col materialization anywhere).
    y = jnp.zeros((bu, HW), jnp.float32)
    for ky in range(3):
        for kx in range(3):
            start = ky * W + kx
            tap = npf_ref[:, start:start + HW]              # (Cn, HW)
            if kx == 0:
                tap = tap * m_left
            elif kx == 2:
                tap = tap * m_right
            y = y + jnp.dot(cw_ref[ky * 3 + kx], tap,
                            preferred_element_type=jnp.float32)
    y = y + cb_ref[...]                                     # (BU, HW) f32

    # GroupNorm (per-sample stats; group broadcast via (BU, BU) same-group mat).
    rs = jnp.sum(y, axis=1, keepdims=True)                  # (BU, 1)
    rss = jnp.sum(y * y, axis=1, keepdims=True)             # (BU, 1)
    mu = jnp.dot(gmat_ref[...], rs, preferred_element_type=jnp.float32) * inv_n
    ex2 = jnp.dot(gmat_ref[...], rss, preferred_element_type=jnp.float32) * inv_n
    rstd = jax.lax.rsqrt(ex2 - mu * mu + GN_EPS)
    z = (y - mu) * rstd * gamma_ref[...] + beta_ref[...]
    z = jnp.where(z > 0, z, LEAKY_SLOPE * z)                # LeakyReLU (f32)
    nc = jnp.mean(z, axis=1, keepdims=True)                 # (BU, 1)

    # Attention MLP on per-sample column vectors.
    h = jnp.dot(w1_ref[...], gp_ref[...],
                preferred_element_type=jnp.float32) + b1_ref[...] + nc
    h = jnp.where(h > 0, h, LEAKY_SLOPE * h)
    logits = jnp.dot(w2_ref[...], h,
                     preferred_element_type=jnp.float32) + b2_ref[...]
    logits = logits * temp_inv_ref[0, 0]                    # 1/T from SMEM
    m = jnp.max(logits, axis=0, keepdims=True)
    e = jnp.exp(logits - m)
    scores_ref[...] = e / jnp.sum(e, axis=0, keepdims=True)  # (K, 1)


def _attention_scores(p, gap_bc, noise_pf, nmasks, temperature, Hn, Wn):
    """gap_bc: (B, Cin) f32 GAP of x.  Returns attention scores (B, K) f32."""
    B, Cin = gap_bc.shape
    HW = Hn * Wn
    Cn, HWp = noise_pf.shape[1], noise_pf.shape[2]
    BU = p['w1'].shape[0]
    K = p['w2'].shape[0]
    cg = BU // p['num_groups']
    temp_inv = jnp.reshape(1.0 / jnp.asarray(temperature, jnp.float32), (1, 1))
    gp = gap_bc[:, :, None]                                 # (B, Cin, 1)

    kernel = functools.partial(_attention_kernel, H=Hn, W=Wn,
                               inv_n=1.0 / (cg * HW))
    scores = pl.pallas_call(
        kernel,
        out_shape=jax.ShapeDtypeStruct((B, K, 1), jnp.float32),
        grid=(B,),
        in_specs=[
            pl.BlockSpec(memory_space=pltpu.MemorySpace.SMEM),      # 1/T
            pl.BlockSpec((None, Cn, HWp), lambda b: (b, 0, 0)),     # noise_pf
            pl.BlockSpec((2, HW), lambda b: (0, 0)),                # masks
            pl.BlockSpec((9, BU, Cn), lambda b: (0, 0, 0)),         # cond_w_taps
            pl.BlockSpec((BU, 1), lambda b: (0, 0)),                # cond_b
            pl.BlockSpec((BU, 1), lambda b: (0, 0)),                # gamma
            pl.BlockSpec((BU, 1), lambda b: (0, 0)),                # beta
            pl.BlockSpec((BU, BU), lambda b: (0, 0)),               # group matrix
            pl.BlockSpec((None, Cin, 1), lambda b: (b, 0, 0)),      # GAP(x)
            pl.BlockSpec((BU, Cin), lambda b: (0, 0)),              # w1
            pl.BlockSpec((BU, 1), lambda b: (0, 0)),                # b1
            pl.BlockSpec((K, BU), lambda b: (0, 0)),                # w2
            pl.BlockSpec((K, 1), lambda b: (0, 0)),                 # b2
        ],
        out_specs=pl.BlockSpec((None, K, 1), lambda b: (b, 0, 0)),
        compiler_params=pltpu.CompilerParams(
            dimension_semantics=("parallel",),
            vmem_limit_bytes=_VMEM_LIMIT_BYTES),
    )(temp_inv, noise_pf, nmasks, p['cond_w_taps'], p['cond_b'], p['gn_gamma'],
      p['gn_beta'], p['gmat'], gp, p['w1'], p['b1'], p['w2'], p['b2'])
    return scores[:, :, 0]                                  # (B, K)


# ---------------------------------------------------------------------------
# Kernel 2: dynamic conv with premixed per-sample weights.
#   9 accumulating MXU dots on in-kernel taps, + bias, optional fused
#   LeakyReLU, bf16/f32 store, and a fused global-average-pool side output.
# grid = (B,), "parallel".
# ---------------------------------------------------------------------------
def _dyn_conv_kernel(xpf_ref, masks_ref, w_ref, b_ref, out_ref, gap_ref, *,
                     H, W, apply_lrelu):
    HW = H * W
    cout = out_ref.shape[0]
    m_left = masks_ref[0:1, :]
    m_right = masks_ref[1:2, :]

    acc = jnp.zeros((cout, HW), jnp.float32)
    for ky in range(3):
        for kx in range(3):
            start = ky * W + kx
            tap = xpf_ref[:, start:start + HW]              # (Cin, HW)
            if kx == 0:
                tap = tap * m_left
            elif kx == 2:
                tap = tap * m_right
            acc = acc + jnp.dot(w_ref[ky * 3 + kx], tap,
                                preferred_element_type=jnp.float32)
    y = acc + b_ref[...]                                    # (Cout, HW) f32
    if apply_lrelu:
        y = jnp.where(y > 0, y, LEAKY_SLOPE * y)
    out_ref[...] = y.astype(out_ref.dtype)
    # Fused GAP of this layer's output: consumed by the NEXT layer's attention
    # block, saving it a full activation read from HBM.
    gap_ref[...] = jnp.mean(y, axis=1, keepdims=True)


def _dynamic_conv(mixed_w, mixed_b, xpf, masks, H, W, apply_lrelu, out_dtype):
    B, _, Cout, Cin = mixed_w.shape
    HW = H * W
    HWp = xpf.shape[-1]

    kernel = functools.partial(_dyn_conv_kernel, H=H, W=W,
                               apply_lrelu=apply_lrelu)
    out, gap = pl.pallas_call(
        kernel,
        out_shape=(jax.ShapeDtypeStruct((B, Cout, HW), out_dtype),
                   jax.ShapeDtypeStruct((B, Cout, 1), jnp.float32)),
        grid=(B,),
        in_specs=[
            pl.BlockSpec((None, Cin, HWp), lambda b: (b, 0, 0)),     # padded x
            pl.BlockSpec((2, HW), lambda b: (0, 0)),                 # masks
            pl.BlockSpec((None, 9, Cout, Cin), lambda b: (b, 0, 0, 0)),  # mixed w
            pl.BlockSpec((None, Cout, 1), lambda b: (b, 0, 0)),      # mixed b
        ],
        out_specs=(pl.BlockSpec((None, Cout, HW), lambda b: (b, 0, 0)),
                   pl.BlockSpec((None, Cout, 1), lambda b: (b, 0, 0))),
        compiler_params=pltpu.CompilerParams(
            dimension_semantics=("parallel",),
            vmem_limit_bytes=_VMEM_LIMIT_BYTES),
    )(xpf, masks, mixed_w, mixed_b)
    return out.reshape(B, Cout, H, W), gap[:, :, 0]


# ---------------------------------------------------------------------------
# Standalone elementwise LeakyReLU (only used when it cannot be fused).
# ---------------------------------------------------------------------------
def _leaky_relu_kernel(x_ref, o_ref):
    v = x_ref[...]
    o_ref[...] = jnp.where(v > 0, v, LEAKY_SLOPE * v)


class LeakyReLUPallas:
    def __call__(self, x):
        return pl.pallas_call(
            _leaky_relu_kernel,
            out_shape=jax.ShapeDtypeStruct(x.shape, x.dtype),
        )(x)


# ---------------------------------------------------------------------------
# Module equivalents
# ---------------------------------------------------------------------------
class DynamicConv2dPallas:
    def __init__(self, key, in_channels, out_channels, kernel_size=3, stride=1,
                 padding=1, groups=1, reduction_factor=16, num_kernels=4,
                 dilation=1, bias=True, noise_channels=3):
        # TODO(synk): only the (k=3, stride=1, pad=1, dilation=1, groups=1,
        # bias=True) configuration used by HierarchicalUNet is implemented.
        assert kernel_size == 3 and stride == 1 and padding == 1
        assert dilation == 1 and groups == 1 and bias
        bu = in_channels // reduction_factor
        self.in_channels = in_channels
        self.out_channels = out_channels
        self.num_kernels = num_kernels
        self.noise_channels = noise_channels
        self.Entropy = 0.0          # lazy device scalar after the first call
        self.eps = 1e-6
        num_groups = find_group_number(bu)
        cg = bu // num_groups
        keys = jax.random.split(key, 8)
        s = 0.1
        cond_w = jax.random.normal(keys[0], (bu, noise_channels, 3, 3), jnp.float32) * s
        pk = jax.random.normal(keys[6], (num_kernels, out_channels, in_channels, 3, 3),
                               jnp.float32) * s
        pb = jax.random.normal(keys[7], (num_kernels, out_channels), jnp.float32) * s
        ch_group = jnp.arange(bu) // cg
        self.params = {
            # per-tap layouts (t = ky*3 + kx), matching the in-kernel tap order
            'cond_w_taps': jnp.transpose(cond_w, (2, 3, 0, 1))
                              .reshape(9, bu, noise_channels).astype(_MM_DTYPE),
            'cond_b': (jax.random.normal(keys[1], (bu,), jnp.float32) * s)[:, None],
            'gn_gamma': jnp.ones((bu, 1), jnp.float32),      # nn.GroupNorm defaults
            'gn_beta': jnp.zeros((bu, 1), jnp.float32),
            'gmat': (ch_group[:, None] == ch_group[None, :]).astype(jnp.float32),
            'num_groups': num_groups,
            'w1': jax.random.normal(keys[2], (bu, in_channels), jnp.float32) * s,
            'b1': (jax.random.normal(keys[3], (bu,), jnp.float32) * s)[:, None],
            'w2': jax.random.normal(keys[4], (num_kernels, bu), jnp.float32) * s,
            'b2': (jax.random.normal(keys[5], (num_kernels,), jnp.float32) * s)[:, None],
            'pk_taps': jnp.transpose(pk, (0, 3, 4, 1, 2))
                          .reshape(num_kernels, 9, out_channels, in_channels),
            'pb': pb,
        }

    def forward_with_aux(self, x, noise_map, temperature, *, cond_aux=None,
                         gap=None, fuse_leaky_relu=False, out_dtype=jnp.float32):
        B, Cin, H, W = x.shape
        if cond_aux is None:
            Hn, Wn = noise_map.shape[2], noise_map.shape[3]
            cond_aux = (_pad_flat(noise_map, _MM_DTYPE),
                        _boundary_masks(Hn, Wn, _MM_DTYPE), Hn, Wn)
        noise_pf, nmasks, Hn, Wn = cond_aux
        if gap is None:                                   # no fused GAP available
            gap = jnp.mean(x.astype(jnp.float32), axis=(2, 3))        # (B, Cin)

        scores = _attention_scores(self.params, gap, noise_pf, nmasks,
                                   temperature, Hn, Wn)                # (B, K)

        # Entropy bookkeeping kept as a lazy device scalar (no host sync).
        # TODO(synk): under jit this attribute holds a traced value; thread it
        # as explicit state if Entropy must survive a jit boundary.
        neg_ent = -jnp.sum(scores * jnp.log(scores + self.eps), axis=1)
        self.Entropy = self.Entropy + (-jnp.mean(neg_ent))

        # Premix the K parallel kernels / biases once per sample (tiny einsum),
        # cast to the MXU dtype; the conv kernel only streams mixed weights.
        mixed_w = jnp.einsum('bk,ktoc->btoc', scores,
                             self.params['pk_taps']).astype(_MM_DTYPE)
        mixed_b = jnp.einsum('bk,ko->bo', scores, self.params['pb'])[:, :, None]

        xpf = _pad_flat(x, _MM_DTYPE)
        xmasks = _boundary_masks(H, W, _MM_DTYPE)
        out, gap_out = _dynamic_conv(mixed_w, mixed_b, xpf, xmasks, H, W,
                                     fuse_leaky_relu, out_dtype)
        return out, gap_out

    def __call__(self, x, noise_map, temperature):
        out, _ = self.forward_with_aux(x, noise_map, temperature)
        return out


class DynamicSequentialPallas:
    """Equivalent of Dynamic_Sequential.

    Fuses DynamicConv2d + LeakyReLU pairs, shares the padded noise map across
    layers, threads the fused global-average-pool between consecutive dynamic
    convs, and keeps intermediate activations in bf16 (final output f32)."""

    def __init__(self, *layers):
        self.layers = list(layers)

    def __call__(self, x, condition, temperature):
        Hn, Wn = condition.shape[2], condition.shape[3]
        cond_aux = (_pad_flat(condition, _MM_DTYPE),
                    _boundary_masks(Hn, Wn, _MM_DTYPE), Hn, Wn)
        gap = None
        i, n = 0, len(self.layers)
        while i < n:
            layer = self.layers[i]
            if isinstance(layer, DynamicConv2dPallas):
                fuse = (i + 1 < n) and isinstance(self.layers[i + 1], LeakyReLUPallas)
                nxt_i = i + (2 if fuse else 1)
                nxt_is_dyn = nxt_i < n and isinstance(self.layers[nxt_i],
                                                      DynamicConv2dPallas)
                out_dtype = _MM_DTYPE if nxt_is_dyn else jnp.float32
                x, gap_out = layer.forward_with_aux(
                    x, condition, temperature, cond_aux=cond_aux, gap=gap,
                    fuse_leaky_relu=fuse, out_dtype=out_dtype)
                gap = gap_out if nxt_is_dyn else None
                i = nxt_i
            else:
                x = layer(x)
                gap = None      # activation changed outside the dyn-conv path
                i += 1
        return x


if __name__ == "__main__":
    key = jax.random.PRNGKey(0)
    kx, kn, k1, k2 = jax.random.split(key, 4)

    B, Cin, H, W = 2, 16, 16, 16
    noise_channels = 3
    x = jax.random.normal(kx, (B, Cin, H, W), jnp.float32)
    condition = jax.random.normal(kn, (B, noise_channels, H, W), jnp.float32)
    temperature = 1.5

    model = DynamicSequentialPallas(
        DynamicConv2dPallas(k1, in_channels=16, out_channels=16, reduction_factor=4),
        LeakyReLUPallas(),
        DynamicConv2dPallas(k2, in_channels=16, out_channels=8, reduction_factor=4),
    )

    out = model(x, condition, temperature)
    jax.block_until_ready(out)
    assert out.shape == (B, 8, H, W), out.shape
    assert out.dtype == jnp.float32
    print("KERNEL_OK")
</pallas_src>

<mosaic_0001>
module attributes {stable_mosaic.version = 11 : i64} {
  func.func @_attention_kernel(%arg0: i32, %arg1: memref<1x1xf32, #tpu.memory_space<smem>>, %arg2: memref<1x3x290xbf16, #tpu.memory_space<vmem>>, %arg3: memref<2x256xbf16, #tpu.memory_space<vmem>>, %arg4: memref<9x4x3xbf16, #tpu.memory_space<vmem>>, %arg5: memref<4x1xf32, #tpu.memory_space<vmem>>, %arg6: memref<4x1xf32, #tpu.memory_space<vmem>>, %arg7: memref<4x1xf32, #tpu.memory_space<vmem>>, %arg8: memref<4x4xf32, #tpu.memory_space<vmem>>, %arg9: memref<1x16x1xf32, #tpu.memory_space<vmem>>, %arg10: memref<4x16xf32, #tpu.memory_space<vmem>>, %arg11: memref<4x1xf32, #tpu.memory_space<vmem>>, %arg12: memref<4x4xf32, #tpu.memory_space<vmem>>, %arg13: memref<4x1xf32, #tpu.memory_space<vmem>>, %arg14: memref<1x4x1xf32, #tpu.memory_space<vmem>>) attributes {dimension_semantics = [#tpu.dimension_semantics<parallel>], iteration_bounds = array<i64: 2>, scalar_prefetch = 0 : i64, scratch_operands = 0 : i64, tpu.core_type = #tpu.core_type<tc>, window_params = [{transform_indices = @transform_0, window_bounds = array<i64: 1, 1>}, {transform_indices = @transform_1, window_bounds = array<i64: 1, 3, 290>}, {pipeline_mode = #tpu.pipeline_mode<synchronous>, transform_indices = @transform_2, window_bounds = array<i64: 2, 256>}, {pipeline_mode = #tpu.pipeline_mode<synchronous>, transform_indices = @transform_3, window_bounds = array<i64: 9, 4, 3>}, {pipeline_mode = #tpu.pipeline_mode<synchronous>, transform_indices = @transform_4, window_bounds = array<i64: 4, 1>}, {pipeline_mode = #tpu.pipeline_mode<synchronous>, transform_indices = @transform_5, window_bounds = array<i64: 4, 1>}, {pipeline_mode = #tpu.pipeline_mode<synchronous>, transform_indices = @transform_6, window_bounds = array<i64: 4, 1>}, {pipeline_mode = #tpu.pipeline_mode<synchronous>, transform_indices = @transform_7, window_bounds = array<i64: 4, 4>}, {transform_indices = @transform_8, window_bounds = array<i64: 1, 16, 1>}, {pipeline_mode = #tpu.pipeline_mode<synchronous>, transform_indices = @transform_9, window_bounds = array<i64: 4, 16>}, {pipeline_mode = #tpu.pipeline_mode<synchronous>, transform_indices = @transform_10, window_bounds = array<i64: 4, 1>}, {pipeline_mode = #tpu.pipeline_mode<synchronous>, transform_indices = @transform_11, window_bounds = array<i64: 4, 4>}, {pipeline_mode = #tpu.pipeline_mode<synchronous>, transform_indices = @transform_12, window_bounds = array<i64: 4, 1>}, {transform_indices = @transform_13, window_bounds = array<i64: 1, 4, 1>}]} {
    %c0 = arith.constant 0 : index
    %c0_0 = arith.constant 0 : index
    %0 = vector.load %arg3[%c0, %c0_0] : memref<2x256xbf16, #tpu.memory_space<vmem>>, vector<1x256xbf16>
    %c1 = arith.constant 1 : index
    %c0_1 = arith.constant 0 : index
    %1 = vector.load %arg3[%c1, %c0_1] : memref<2x256xbf16, #tpu.memory_space<vmem>>, vector<1x256xbf16>
    %cst = arith.constant 0.000000e+00 : f32
    %2 = vector.broadcast %cst : f32 to vector<4x256xf32>
    %c0_2 = arith.constant 0 : index
    %c0_3 = arith.constant 0 : index
    %c0_4 = arith.constant 0 : index
    %3 = vector.load %arg2[%c0_2, %c0_3, %c0_4] : memref<1x3x290xbf16, #tpu.memory_space<vmem>>, vector<1x3x256xbf16>
    %4 = vector.shape_cast %3 : vector<1x3x256xbf16> to vector<3x256xbf16>
    %5 = vector.broadcast %0 : vector<1x256xbf16> to vector<3x256xbf16>
    %6 = arith.mulf %4, %5 : vector<3x256xbf16>
    %c0_5 = arith.constant 0 : index
    %c0_6 = arith.constant 0 : index
    %c0_7 = arith.constant 0 : index
    %7 = vector.load %arg4[%c0_5, %c0_6, %c0_7] : memref<9x4x3xbf16, #tpu.memory_space<vmem>>, vector<1x4x3xbf16>
    %8 = vector.shape_cast %7 : vector<1x4x3xbf16> to vector<4x3xbf16>
    %cst_8 = arith.constant dense<0.000000e+00> : vector<4x256xf32>
    %9 = tpu.matmul %8, %6, %cst_8 {dimension_numbers = #tpu.dot_dimension_numbers<[1], [0], [0], [1], [0, 0, 1, 1], [], []>} : vector<4x3xbf16>, vector<3x256xbf16>, vector<4x256xf32> -> vector<4x256xf32>
    %10 = arith.addf %2, %9 : vector<4x256xf32>
    %c0_9 = arith.constant 0 : index
    %c0_10 = arith.constant 0 : index
    %c1_11 = arith.constant 1 : index
    %11 = vector.load %arg2[%c0_9, %c0_10, %c1_11] : memref<1x3x290xbf16, #tpu.memory_space<vmem>>, vector<1x3x256xbf16>
    %12 = vector.shape_cast %11 : vector<1x3x256xbf16> to vector<3x256xbf16>
    %c1_12 = arith.constant 1 : index
    %c0_13 = arith.constant 0 : index
    %c0_14 = arith.constant 0 : index
    %13 = vector.load %arg4[%c1_12, %c0_13, %c0_14] : memref<9x4x3xbf16, #tpu.memory_space<vmem>>, vector<1x4x3xbf16>
    %14 = vector.shape_cast %13 : vector<1x4x3xbf16> to vector<4x3xbf16>
    %cst_15 = arith.constant dense<0.000000e+00> : vector<4x256xf32>
    %15 = tpu.matmul %14, %12, %cst_15 {dimension_numbers = #tpu.dot_dimension_numbers<[1], [0], [0], [1], [0, 0, 1, 1], [], []>} : vector<4x3xbf16>, vector<3x256xbf16>, vector<4x256xf32> -> vector<4x256xf32>
    %16 = arith.addf %10, %15 : vector<4x256xf32>
    %c0_16 = arith.constant 0 : index
    %c0_17 = arith.constant 0 : index
    %c2 = arith.constant 2 : index
    %17 = vector.load %arg2[%c0_16, %c0_17, %c2] : memref<1x3x290xbf16, #tpu.memory_space<vmem>>, vector<1x3x256xbf16>
    %18 = vector.shape_cast %17 : vector<1x3x256xbf16> to vector<3x256xbf16>
    %19 = vector.broadcast %1 : vector<1x256xbf16> to vector<3x256xbf16>
    %20 = arith.mulf %18, %19 : vector<3x256xbf16>
    %c2_18 = arith.constant 2 : index
    %c0_19 = arith.constant 0 : index
    %c0_20 = arith.constant 0 : index
    %21 = vector.load %arg4[%c2_18, %c0_19, %c0_20] : memref<9x4x3xbf16, #tpu.memory_space<vmem>>, vector<1x4x3xbf16>
    %22 = vector.shape_cast %21 : vector<1x4x3xbf16> to vector<4x3xbf16>
    %cst_21 = arith.constant dense<0.000000e+00> : vector<4x256xf32>
    %23 = tpu.matmul %22, %20, %cst_21 {dimension_numbers = #tpu.dot_dimension_numbers<[1], [0], [0], [1], [0, 0, 1, 1], [], []>} : vector<4x3xbf16>, vector<3x256xbf16>, vector<4x256xf32> -> vector<4x256xf32>
    %24 = arith.addf %16, %23 : vector<4x256xf32>
    %c0_22 = arith.constant 0 : index
    %c0_23 = arith.constant 0 : index
    %c16 = arith.constant 16 : index
    %25 = vector.load %arg2[%c0_22, %c0_23, %c16] : memref<1x3x290xbf16, #tpu.memory_space<vmem>>, vector<1x3x256xbf16>
    %26 = vector.shape_cast %25 : vector<1x3x256xbf16> to vector<3x256xbf16>
    %27 = vector.broadcast %0 : vector<1x256xbf16> to vector<3x256xbf16>
    %28 = arith.mulf %26, %27 : vector<3x256xbf16>
    %c3 = arith.constant 3 : index
    %c0_24 = arith.constant 0 : index
    %c0_25 = arith.constant 0 : index
    %29 = vector.load %arg4[%c3, %c0_24, %c0_25] : memref<9x4x3xbf16, #tpu.memory_space<vmem>>, vector<1x4x3xbf16>
    %30 = vector.shape_cast %29 : vector<1x4x3xbf16> to vector<4x3xbf16>
    %cst_26 = arith.constant dense<0.000000e+00> : vector<4x256xf32>
    %31 = tpu.matmul %30, %28, %cst_26 {dimension_numbers = #tpu.dot_dimension_numbers<[1], [0], [0], [1], [0, 0, 1, 1], [], []>} : vector<4x3xbf16>, vector<3x256xbf16>, vector<4x256xf32> -> vector<4x256xf32>
    %32 = arith.addf %24, %31 : vector<4x256xf32>
    %c0_27 = arith.constant 0 : index
    %c0_28 = arith.constant 0 : index
    %c17 = arith.constant 17 : index
    %33 = vector.load %arg2[%c0_27, %c0_28, %c17] : memref<1x3x290xbf16, #tpu.memory_space<vmem>>, vector<1x3x256xbf16>
    %34 = vector.shape_cast %33 : vector<1x3x256xbf16> to vector<3x256xbf16>
    %c4 = arith.constant 4 : index
    %c0_29 = arith.constant 0 : index
    %c0_30 = arith.constant 0 : index
    %35 = vector.load %arg4[%c4, %c0_29, %c0_30] : memref<9x4x3xbf16, #tpu.memory_space<vmem>>, vector<1x4x3xbf16>
    %36 = vector.shape_cast %35 : vector<1x4x3xbf16> to vector<4x3xbf16>
    %cst_31 = arith.constant dense<0.000000e+00> : vector<4x256xf32>
    %37 = tpu.matmul %36, %34, %cst_31 {dimension_numbers = #tpu.dot_dimension_numbers<[1], [0], [0], [1], [0, 0, 1, 1], [], []>} : vector<4x3xbf16>, vector<3x256xbf16>, vector<4x256xf32> -> vector<4x256xf32>
    %38 = arith.addf %32, %37 : vector<4x256xf32>
    %c0_32 = arith.constant 0 : index
    %c0_33 = arith.constant 0 : index
    %c18 = arith.constant 18 : index
    %39 = vector.load %arg2[%c0_32, %c0_33, %c18] : memref<1x3x290xbf16, #tpu.memory_space<vmem>>, vector<1x3x256xbf16>
    %40 = vector.shape_cast %39 : vector<1x3x256xbf16> to vector<3x256xbf16>
    %41 = vector.broadcast %1 : vector<1x256xbf16> to vector<3x256xbf16>
    %42 = arith.mulf %40, %41 : vector<3x256xbf16>
    %c5 = arith.constant 5 : index
    %c0_34 = arith.constant 0 : index
    %c0_35 = arith.constant 0 : index
    %43 = vector.load %arg4[%c5, %c0_34, %c0_35] : memref<9x4x3xbf16, #tpu.memory_space<vmem>>, vector<1x4x3xbf16>
    %44 = vector.shape_cast %43 : vector<1x4x3xbf16> to vector<4x3xbf16>
    %cst_36 = arith.constant dense<0.000000e+00> : vector<4x256xf32>
    %45 = tpu.matmul %44, %42, %cst_36 {dimension_numbers = #tpu.dot_dimension_numbers<[1], [0], [0], [1], [0, 0, 1, 1], [], []>} : vector<4x3xbf16>, vector<3x256xbf16>, vector<4x256xf32> -> vector<4x256xf32>
    %46 = arith.addf %38, %45 : vector<4x256xf32>
    %c0_37 = arith.constant 0 : index
    %c0_38 = arith.constant 0 : index
    %c32 = arith.constant 32 : index
    %47 = vector.load %arg2[%c0_37, %c0_38, %c32] : memref<1x3x290xbf16, #tpu.memory_space<vmem>>, vector<1x3x256xbf16>
    %48 = vector.shape_cast %47 : vector<1x3x256xbf16> to vector<3x256xbf16>
    %49 = vector.broadcast %0 : vector<1x256xbf16> to vector<3x256xbf16>
    %50 = arith.mulf %48, %49 : vector<3x256xbf16>
    %c6 = arith.constant 6 : index
    %c0_39 = arith.constant 0 : index
    %c0_40 = arith.constant 0 : index
    %51 = vector.load %arg4[%c6, %c0_39, %c0_40] : memref<9x4x3xbf16, #tpu.memory_space<vmem>>, vector<1x4x3xbf16>
    %52 = vector.shape_cast %51 : vector<1x4x3xbf16> to vector<4x3xbf16>
    %cst_41 = arith.constant dense<0.000000e+00> : vector<4x256xf32>
    %53 = tpu.matmul %52, %50, %cst_41 {dimension_numbers = #tpu.dot_dimension_numbers<[1], [0], [0], [1], [0, 0, 1, 1], [], []>} : vector<4x3xbf16>, vector<3x256xbf16>, vector<4x256xf32> -> vector<4x256xf32>
    %54 = arith.addf %46, %53 : vector<4x256xf32>
    %c0_42 = arith.constant 0 : index
    %c0_43 = arith.constant 0 : index
    %c33 = arith.constant 33 : index
    %55 = vector.load %arg2[%c0_42, %c0_43, %c33] : memref<1x3x290xbf16, #tpu.memory_space<vmem>>, vector<1x3x256xbf16>
    %56 = vector.shape_cast %55 : vector<1x3x256xbf16> to vector<3x256xbf16>
    %c7 = arith.constant 7 : index
    %c0_44 = arith.constant 0 : index
    %c0_45 = arith.constant 0 : index
    %57 = vector.load %arg4[%c7, %c0_44, %c0_45] : memref<9x4x3xbf16, #tpu.memory_space<vmem>>, vector<1x4x3xbf16>
    %58 = vector.shape_cast %57 : vector<1x4x3xbf16> to vector<4x3xbf16>
    %cst_46 = arith.constant dense<0.000000e+00> : vector<4x256xf32>
    %59 = tpu.matmul %58, %56, %cst_46 {dimension_numbers = #tpu.dot_dimension_numbers<[1], [0], [0], [1], [0, 0, 1, 1], [], []>} : vector<4x3xbf16>, vector<3x256xbf16>, vector<4x256xf32> -> vector<4x256xf32>
    %60 = arith.addf %54, %59 : vector<4x256xf32>
    %c0_47 = arith.constant 0 : index
    %c0_48 = arith.constant 0 : index
    %c34 = arith.constant 34 : index
    %61 = vector.load %arg2[%c0_47, %c0_48, %c34] : memref<1x3x290xbf16, #tpu.memory_space<vmem>>, vector<1x3x256xbf16>
    %62 = vector.shape_cast %61 : vector<1x3x256xbf16> to vector<3x256xbf16>
    %63 = vector.broadcast %1 : vector<1x256xbf16> to vector<3x256xbf16>
    %64 = arith.mulf %62, %63 : vector<3x256xbf16>
    %c8 = arith.constant 8 : index
    %c0_49 = arith.constant 0 : index
    %c0_50 = arith.constant 0 : index
    %65 = vector.load %arg4[%c8, %c0_49, %c0_50] : memref<9x4x3xbf16, #tpu.memory_space<vmem>>, vector<1x4x3xbf16>
    %66 = vector.shape_cast %65 : vector<1x4x3xbf16> to vector<4x3xbf16>
    %cst_51 = arith.constant dense<0.000000e+00> : vector<4x256xf32>
    %67 = tpu.matmul %66, %64, %cst_51 {dimension_numbers = #tpu.dot_dimension_numbers<[1], [0], [0], [1], [0, 0, 1, 1], [], []>} : vector<4x3xbf16>, vector<3x256xbf16>, vector<4x256xf32> -> vector<4x256xf32>
    %68 = arith.addf %60, %67 : vector<4x256xf32>
    %c0_52 = arith.constant 0 : index
    %c0_53 = arith.constant 0 : index
    %69 = vector.load %arg5[%c0_52, %c0_53] : memref<4x1xf32, #tpu.memory_space<vmem>>, vector<4x1xf32>
    %70 = vector.broadcast %69 : vector<4x1xf32> to vector<4x256xf32>
    %71 = arith.addf %68, %70 : vector<4x256xf32>
    %cst_54 = arith.constant dense<0.000000e+00> : vector<4xf32>
    %72 = vector.multi_reduction <add>, %71, %cst_54 [1] : vector<4x256xf32> to vector<4xf32>
    %73 = vector.shape_cast %72 : vector<4xf32> to vector<4x1xf32>
    %74 = arith.mulf %71, %71 : vector<4x256xf32>
    %cst_55 = arith.constant dense<0.000000e+00> : vector<4xf32>
    %75 = vector.multi_reduction <add>, %74, %cst_55 [1] : vector<4x256xf32> to vector<4xf32>
    %76 = vector.shape_cast %75 : vector<4xf32> to vector<4x1xf32>
    %c0_56 = arith.constant 0 : index
    %c0_57 = arith.constant 0 : index
    %77 = vector.load %arg8[%c0_56, %c0_57] : memref<4x4xf32, #tpu.memory_space<vmem>>, vector<4x4xf32>
    %cst_58 = arith.constant dense<0.000000e+00> : vector<4x1xf32>
    %78 = tpu.matmul %77, %73, %cst_58 {dimension_numbers = #tpu.dot_dimension_numbers<[1], [0], [0], [1], [0, 0, 1, 1], [], []>} : vector<4x4xf32>, vector<4x1xf32>, vector<4x1xf32> -> vector<4x1xf32>
    %cst_59 = arith.constant 9.765625E-4 : f32
    %79 = vector.broadcast %cst_59 : f32 to vector<4x1xf32>
    %80 = arith.mulf %78, %79 : vector<4x1xf32>
    %c0_60 = arith.constant 0 : index
    %c0_61 = arith.constant 0 : index
    %81 = vector.load %arg8[%c0_60, %c0_61] : memref<4x4xf32, #tpu.memory_space<vmem>>, vector<4x4xf32>
    %cst_62 = arith.constant dense<0.000000e+00> : vector<4x1xf32>
    %82 = tpu.matmul %81, %76, %cst_62 {dimension_numbers = #tpu.dot_dimension_numbers<[1], [0], [0], [1], [0, 0, 1, 1], [], []>} : vector<4x4xf32>, vector<4x1xf32>, vector<4x1xf32> -> vector<4x1xf32>
    %cst_63 = arith.constant 9.765625E-4 : f32
    %83 = vector.broadcast %cst_63 : f32 to vector<4x1xf32>
    %84 = arith.mulf %82, %83 : vector<4x1xf32>
    %85 = arith.mulf %80, %80 : vector<4x1xf32>
    %86 = arith.subf %84, %85 : vector<4x1xf32>
    %cst_64 = arith.constant 9.99999974E-6 : f32
    %87 = vector.broadcast %cst_64 : f32 to vector<4x1xf32>
    %88 = arith.addf %86, %87 : vector<4x1xf32>
    %89 = math.rsqrt %88 : vector<4x1xf32>
    %90 = vector.broadcast %80 : vector<4x1xf32> to vector<4x256xf32>
    %91 = arith.subf %71, %90 : vector<4x256xf32>
    %92 = vector.broadcast %89 : vector<4x1xf32> to vector<4x256xf32>
    %93 = arith.mulf %91, %92 : vector<4x256xf32>
    %c0_65 = arith.constant 0 : index
    %c0_66 = arith.constant 0 : index
    %94 = vector.load %arg6[%c0_65, %c0_66] : memref<4x1xf32, #tpu.memory_space<vmem>>, vector<4x1xf32>
    %95 = vector.broadcast %94 : vector<4x1xf32> to vector<4x256xf32>
    %96 = arith.mulf %93, %95 : vector<4x256xf32>
    %c0_67 = arith.constant 0 : index
    %c0_68 = arith.constant 0 : index
    %97 = vector.load %arg7[%c0_67, %c0_68] : memref<4x1xf32, #tpu.memory_space<vmem>>, vector<4x1xf32>
    %98 = vector.broadcast %97 : vector<4x1xf32> to vector<4x256xf32>
    %99 = arith.addf %96, %98 : vector<4x256xf32>
    %cst_69 = arith.constant 0.000000e+00 : f32
    %100 = vector.broadcast %cst_69 : f32 to vector<4x256xf32>
    %101 = arith.cmpf ogt, %99, %100 : vector<4x256xf32>
    %cst_70 = arith.constant 0.00999999977 : f32
    %102 = vector.broadcast %cst_70 : f32 to vector<4x256xf32>
    %103 = arith.mulf %102, %99 : vector<4x256xf32>
    %104 = arith.select %101, %99, %103 : vector<4x256xi1>, vector<4x256xf32>
    %cst_71 = arith.constant dense<0.000000e+00> : vector<4xf32>
    %105 = vector.multi_reduction <add>, %104, %cst_71 [1] : vector<4x256xf32> to vector<4xf32>
    %106 = vector.shape_cast %105 : vector<4xf32> to vector<4x1xf32>
    %cst_72 = arith.constant 2.560000e+02 : f32
    %107 = vector.broadcast %cst_72 : f32 to vector<4x1xf32>
    %108 = arith.divf %106, %107 : vector<4x1xf32>
    %c0_73 = arith.constant 0 : index
    %c0_74 = arith.constant 0 : index
    %109 = vector.load %arg10[%c0_73, %c0_74] : memref<4x16xf32, #tpu.memory_space<vmem>>, vector<4x16xf32>
    %c0_75 = arith.constant 0 : index
    %c0_76 = arith.constant 0 : index
    %c0_77 = arith.constant 0 : index
    %110 = vector.load %arg9[%c0_75, %c0_76, %c0_77] : memref<1x16x1xf32, #tpu.memory_space<vmem>>, vector<1x16x1xf32>
    %111 = vector.shape_cast %110 : vector<1x16x1xf32> to vector<16x1xf32>
    %cst_78 = arith.constant dense<0.000000e+00> : vector<4x1xf32>
    %112 = tpu.matmul %109, %111, %cst_78 {dimension_numbers = #tpu.dot_dimension_numbers<[1], [0], [0], [1], [0, 0, 1, 1], [], []>} : vector<4x16xf32>, vector<16x1xf32>, vector<4x1xf32> -> vector<4x1xf32>
    %c0_79 = arith.constant 0 : index
    %c0_80 = arith.constant 0 : index
    %113 = vector.load %arg11[%c0_79, %c0_80] : memref<4x1xf32, #tpu.memory_space<vmem>>, vector<4x1xf32>
    %114 = arith.addf %112, %113 : vector<4x1xf32>
    %115 = arith.addf %114, %108 : vector<4x1xf32>
    %cst_81 = arith.constant 0.000000e+00 : f32
    %116 = vector.broadcast %cst_81 : f32 to vector<4x1xf32>
    %117 = arith.cmpf ogt, %115, %116 : vector<4x1xf32>
    %cst_82 = arith.constant 0.00999999977 : f32
    %118 = vector.broadcast %cst_82 : f32 to vector<4x1xf32>
    %119 = arith.mulf %118, %115 : vector<4x1xf32>
    %120 = arith.select %117, %115, %119 : vector<4x1xi1>, vector<4x1xf32>
    %c0_83 = arith.constant 0 : index
    %c0_84 = arith.constant 0 : index
    %121 = vector.load %arg12[%c0_83, %c0_84] : memref<4x4xf32, #tpu.memory_space<vmem>>, vector<4x4xf32>
    %cst_85 = arith.constant dense<0.000000e+00> : vector<4x1xf32>
    %122 = tpu.matmul %121, %120, %cst_85 {dimension_numbers = #tpu.dot_dimension_numbers<[1], [0], [0], [1], [0, 0, 1, 1], [], []>} : vector<4x4xf32>, vector<4x1xf32>, vector<4x1xf32> -> vector<4x1xf32>
    %c0_86 = arith.constant 0 : index
    %c0_87 = arith.constant 0 : index
    %123 = vector.load %arg13[%c0_86, %c0_87] : memref<4x1xf32, #tpu.memory_space<vmem>>, vector<4x1xf32>
    %124 = arith.addf %122, %123 : vector<4x1xf32>
    %c0_88 = arith.constant 0 : index
    %c0_89 = arith.constant 0 : index
    %125 = memref.load %arg1[%c0_88, %c0_89] : memref<1x1xf32, #tpu.memory_space<smem>>
    %126 = vector.broadcast %125 : f32 to vector<4x1xf32>
    %127 = arith.mulf %124, %126 : vector<4x1xf32>
    %cst_90 = arith.constant dense<0xFF800000> : vector<1xf32>
    %128 = vector.multi_reduction <maximumf>, %127, %cst_90 [0] : vector<4x1xf32> to vector<1xf32>
    %129 = vector.shape_cast %128 : vector<1xf32> to vector<1x1xf32>
    %130 = vector.broadcast %129 : vector<1x1xf32> to vector<4x1xf32>
    %131 = arith.subf %127, %130 : vector<4x1xf32>
    %132 = math.exp %131 : vector<4x1xf32>
    %cst_91 = arith.constant dense<0.000000e+00> : vector<1xf32>
    %133 = vector.multi_reduction <add>, %132, %cst_91 [0] : vector<4x1xf32> to vector<1xf32>
    %134 = vector.shape_cast %133 : vector<1xf32> to vector<1x1xf32>
    %135 = vector.broadcast %134 : vector<1x1xf32> to vector<4x1xf32>
    %136 = arith.divf %132, %135 : vector<4x1xf32>
    %c0_92 = arith.constant 0 : index
    %c0_93 = arith.constant 0 : index
    %c0_94 = arith.constant 0 : index
    %137 = vector.load %arg14[%c0_92, %c0_93, %c0_94] : memref<1x4x1xf32, #tpu.memory_space<vmem>>, vector<1x4x1xf32>
    %138 = vector.shape_cast %137 : vector<1x4x1xf32> to vector<4x1xf32>
    %139 = vector.shape_cast %136 : vector<4x1xf32> to vector<1x4x1xf32>
    tpu.vector_store %arg14[%c0_92, %c0_93, %c0_94], %139 {strides = array<i32>} : memref<1x4x1xf32, #tpu.memory_space<vmem>>, vector<1x4x1xf32>,
    return
  }
  func.func @transform_0(%arg0: i32) -> (i32, i32) {
    %c0_i32 = arith.constant 0 : i32
    %c0_i32_0 = arith.constant 0 : i32
    %c0_i32_1 = arith.constant 0 : i32
    return %c0_i32, %c0_i32_0 : i32, i32
  }
  func.func @transform_1(%arg0: i32) -> (i32, i32, i32) {
    %c0_i32 = arith.constant 0 : i32
    %c0_i32_0 = arith.constant 0 : i32
    %c0_i32_1 = arith.constant 0 : i32
    return %arg0, %c0_i32, %c0_i32_0 : i32, i32, i32
  }
  func.func @transform_2(%arg0: i32) -> (i32, i32) {
    %c0_i32 = arith.constant 0 : i32
    %c0_i32_0 = arith.constant 0 : i32
    %c0_i32_1 = arith.constant 0 : i32
    return %c0_i32, %c0_i32_0 : i32, i32
  }
  func.func @transform_3(%arg0: i32) -> (i32, i32, i32) {
    %c0_i32 = arith.constant 0 : i32
    %c0_i32_0 = arith.constant 0 : i32
    %c0_i32_1 = arith.constant 0 : i32
    %c0_i32_2 = arith.constant 0 : i32
    return %c0_i32, %c0_i32_0, %c0_i32_1 : i32, i32, i32
  }
  func.func @transform_4(%arg0: i32) -> (i32, i32) {
    %c0_i32 = arith.constant 0 : i32
    %c0_i32_0 = arith.constant 0 : i32
    %c0_i32_1 = arith.constant 0 : i32
    return %c0_i32, %c0_i32_0 : i32, i32
  }
  func.func @transform_5(%arg0: i32) -> (i32, i32) {
    %c0_i32 = arith.constant 0 : i32
    %c0_i32_0 = arith.constant 0 : i32
    %c0_i32_1 = arith.constant 0 : i32
    return %c0_i32, %c0_i32_0 : i32, i32
  }
  func.func @transform_6(%arg0: i32) -> (i32, i32) {
    %c0_i32 = arith.constant 0 : i32
    %c0_i32_0 = arith.constant 0 : i32
    %c0_i32_1 = arith.constant 0 : i32
    return %c0_i32, %c0_i32_0 : i32, i32
  }
  func.func @transform_7(%arg0: i32) -> (i32, i32) {
    %c0_i32 = arith.constant 0 : i32
    %c0_i32_0 = arith.constant 0 : i32
    %c0_i32_1 = arith.constant 0 : i32
    return %c0_i32, %c0_i32_0 : i32, i32
  }
  func.func @transform_8(%arg0: i32) -> (i32, i32, i32) {
    %c0_i32 = arith.constant 0 : i32
    %c0_i32_0 = arith.constant 0 : i32
    %c0_i32_1 = arith.constant 0 : i32
    return %arg0, %c0_i32, %c0_i32_0 : i32, i32, i32
  }
  func.func @transform_9(%arg0: i32) -> (i32, i32) {
    %c0_i32 = arith.constant 0 : i32
    %c0_i32_0 = arith.constant 0 : i32
    %c0_i32_1 = arith.constant 0 : i32
    return %c0_i32, %c0_i32_0 : i32, i32
  }
  func.func @transform_10(%arg0: i32) -> (i32, i32) {
    %c0_i32 = arith.constant 0 : i32
    %c0_i32_0 = arith.constant 0 : i32
    %c0_i32_1 = arith.constant 0 : i32
    return %c0_i32, %c0_i32_0 : i32, i32
  }
  func.func @transform_11(%arg0: i32) -> (i32, i32) {
    %c0_i32 = arith.constant 0 : i32
    %c0_i32_0 = arith.constant 0 : i32
    %c0_i32_1 = arith.constant 0 : i32
    return %c0_i32, %c0_i32_0 : i32, i32
  }
  func.func @transform_12(%arg0: i32) -> (i32, i32) {
    %c0_i32 = arith.constant 0 : i32
    %c0_i32_0 = arith.constant 0 : i32
    %c0_i32_1 = arith.constant 0 : i32
    return %c0_i32, %c0_i32_0 : i32, i32
  }
  func.func @transform_13(%arg0: i32) -> (i32, i32, i32) {
    %c0_i32 = arith.constant 0 : i32
    %c0_i32_0 = arith.constant 0 : i32
    %c0_i32_1 = arith.constant 0 : i32
    return %arg0, %c0_i32, %c0_i32_0 : i32, i32, i32
  }
}

</mosaic_0001>

<llo_original>
// kernel: tpu_custom_call.1
$region0: #{tpu_custom_call.1}
  #allocation0 [shape = 'u32[]', space=smem, size = 0x4, offset = 0x4, fixed_abs, tag = 'smem constant byte address 0x4 - core index']
  #allocation1 [shape = 'u32[144,128]{1,0:T(1,128)}', space=vmem, size = 0x12000, scoped, tag = 'internal scratch']
  #allocation2 [shape = 'f32[1,1]{1,0:T(1,128)S(6)}', space=smem, size = 0x200, scoped, tag = 'scoped memory for tpu_custom_call.1']
  %s0 = inlined_call_operand.<no memory space> [shape: f32[1,1], index: 0, kind: input, shape index: {}]
  %s1 = inlined_call_operand.vmem [shape: bf16[2,3,290], index: 1, kind: input, shape index: {}]
  %s2 = inlined_call_operand.vmem [shape: bf16[2,256], index: 2, kind: input, shape index: {}]
  %s3 = inlined_call_operand.vmem [shape: bf16[9,4,3], index: 3, kind: input, shape index: {}]
  %s4 = inlined_call_operand.vmem [shape: f32[4,1], index: 4, kind: input, shape index: {}]
  %s5 = inlined_call_operand.vmem [shape: f32[4,1], index: 5, kind: input, shape index: {}]
  %s6 = inlined_call_operand.vmem [shape: f32[4,1], index: 6, kind: input, shape index: {}]
  %s7 = inlined_call_operand.vmem [shape: f32[4,4], index: 7, kind: input, shape index: {}]
  %s8 = inlined_call_operand.vmem [shape: f32[2,16,1], index: 8, kind: input, shape index: {}]
  %s9 = inlined_call_operand.vmem [shape: f32[4,16], index: 9, kind: input, shape index: {}]
  %s10 = inlined_call_operand.vmem [shape: f32[4,1], index: 10, kind: input, shape index: {}]
  %s11 = inlined_call_operand.vmem [shape: f32[4,4], index: 11, kind: input, shape index: {}]
  %s12 = inlined_call_operand.vmem [shape: f32[4,1], index: 12, kind: input, shape index: {}]
  %s13 = inlined_call_operand.vmem [shape: f32[2,4,1], index: 13, kind: output, shape index: {}]
  %s14 = sld [smem:[#allocation0]]
  $region85: #{tpu_custom_call.1} parent=0
    _
  %s16 = ssub.s32 1, %s14
  %s17 = scalar_select 0, %s16, %s14
  %18 = sst [smem:[#allocation2]] %s0
  loop: start=0, step=1, limit=4
  $region2: #{tpu_custom_call.1} parent=0 // loop_pre_header
    _
  $region3: #{tpu_custom_call.1} parent=0 // loop_header
    %s20 = sphi 0, %s24
    %p21 = scmp.ge.s32.totalorder %s20, 4
    %s28 = sphi 0, %s28
    %s30 = sphi 0, %s28
    %s31 = sphi 0, %s30
    %s45 = sphi 0, %s31
    %s51 = sphi 0, %s53
    %s54 = sphi 0, %s51
    %s55 = sphi 0, %s54
    %s71 = sphi 0, %s55
    %s75 = sphi 0, %s75
    %s77 = sphi 0, %s75
    %s78 = sphi 0, %s77
    %s92 = sphi 0, %s78
    %s96 = sphi 0, %s96
    %s98 = sphi 0, %s96
    %s99 = sphi 0, %s98
    %s113 = sphi 0, %s99
    %s117 = sphi 0, %s117
    %s119 = sphi 0, %s117
    %s120 = sphi 0, %s119
    %s134 = sphi 0, %s120
    %s138 = sphi 0, %s138
    %s140 = sphi 0, %s138
    %s141 = sphi 0, %s140
    %s155 = sphi 0, %s141
    %s159 = sphi 0, %s159
    %s161 = sphi 0, %s159
    %s162 = sphi 0, %s161
    %s176 = sphi 0, %s162
    %s180 = sphi 0, %s180
    %s182 = sphi 0, %s180
    %s183 = sphi 0, %s182
    %s197 = sphi 0, %s183
    %s203 = sphi 0, %s205
    %s206 = sphi 0, %s203
    %s207 = sphi 0, %s206
    %s223 = sphi 0, %s207
    %s227 = sphi 0, %s227
    %s229 = sphi 0, %s227
    %s230 = sphi 0, %s229
    %s244 = sphi 0, %s230
    %s248 = sphi 0, %s248
    %s250 = sphi 0, %s248
    %s251 = sphi 0, %s250
    %s265 = sphi 0, %s251
    %s269 = sphi 0, %s269
    %s271 = sphi 0, %s269
    %s272 = sphi 0, %s271
    %s286 = sphi 0, %s272
    %s290 = sphi 0, %s290
    %s292 = sphi 0, %s290
    %s293 = sphi 0, %s292
    %s307 = sphi 0, %s293
    %s313 = sphi 0, %s315
    %s316 = sphi 0, %s313
    %s317 = sphi 0, %s316
    %s333 = sphi 0, %s317
  $region4: #{tpu_custom_call.1} parent=0 // loop_header_branch
    %23 = sbr.rel (%p21) target = $region8
  $region5: #{tpu_custom_call.1} parent=0 // loop_body
    %s25 = ssub.s32 %s20, 1
    %s26 = ssub.s32 %s20, 2
    %s27 = sadd.s32 %s20, 1
    %s29 = sadd.s32 %s28, 1
    %p32 = scmp.eq.s32.totalorder %s20, 1
    %p33 = scmp.ne.s32.totalorder %s28, %s30
    %p34 = scmp.eq.s32.totalorder %s20, 0
    %p35 = por %p33, %p34
    %p36 = scmp.ne.s32.totalorder %s28, %s30
    %p37 = scmp.eq.s32.totalorder %s25, 1
    %p38 = por %p36, %p37
    %p39 = scmp.ne.s32.totalorder %s30, %s31
    %p40 = scmp.eq.s32.totalorder %s25, 0
    %p41 = por %p39, %p40
    %p42 = scmp.ne.s32.totalorder %s30, %s31
    %p43 = scmp.eq.s32.totalorder %s26, 1
    %p44 = por %p42, %p43
    %p46 = scmp.ne.s32.totalorder %s31, %s45
    %p47 = scmp.eq.s32.totalorder %s26, 0
    %p48 = por %p46, %p47
    %s49 = ssub.s32 %s20, %s27
    %p50 = scmp.eq.s32.totalorder %s49, 0
    %s52 = sadd.s32 %s51, 1
    %s53 = scalar_select %p50, %s51, %s52
    %p56 = pneg %p50
    %p57 = scmp.eq.s32.totalorder %s20, 1
    %p58 = por %p56, %p57
    %p59 = scmp.ne.s32.totalorder %s51, %s54
    %p60 = scmp.eq.s32.totalorder %s20, 0
    %p61 = por %p59, %p60
    %p62 = scmp.ne.s32.totalorder %s51, %s54
    %p63 = scmp.eq.s32.totalorder %s25, 1
    %p64 = por %p62, %p63
    %p65 = scmp.ne.s32.totalorder %s54, %s55
    %p66 = scmp.eq.s32.totalorder %s25, 0
    %p67 = por %p65, %p66
    %p68 = scmp.ne.s32.totalorder %s54, %s55
    %p69 = scmp.eq.s32.totalorder %s26, 1
    %p70 = por %p68, %p69
    %p72 = scmp.ne.s32.totalorder %s55, %s71
    %p73 = scmp.eq.s32.totalorder %s26, 0
    %p74 = por %p72, %p73
    %s76 = sadd.s32 %s75, 1
    %p79 = scmp.eq.s32.totalorder %s20, 1
    %p80 = scmp.ne.s32.totalorder %s75, %s77
    %p81 = scmp.eq.s32.totalorder %s20, 0
    %p82 = por %p80, %p81
    %p83 = scmp.ne.s32.totalorder %s75, %s77
    %p84 = scmp.eq.s32.totalorder %s25, 1
    %p85 = por %p83, %p84
    %p86 = scmp.ne.s32.totalorder %s77, %s78
    %p87 = scmp.eq.s32.totalorder %s25, 0
    %p88 = por %p86, %p87
    %p89 = scmp.ne.s32.totalorder %s77, %s78
    %p90 = scmp.eq.s32.totalorder %s26, 1
    %p91 = por %p89, %p90
    %p93 = scmp.ne.s32.totalorder %s78, %s92
    %p94 = scmp.eq.s32.totalorder %s26, 0
    %p95 = por %p93, %p94
    %s97 = sadd.s32 %s96, 1
    %p100 = scmp.eq.s32.totalorder %s20, 1
    %p101 = scmp.ne.s32.totalorder %s96, %s98
    %p102 = scmp.eq.s32.totalorder %s20, 0
    %p103 = por %p101, %p102
    %p104 = scmp.ne.s32.totalorder %s96, %s98
    %p105 = scmp.eq.s32.totalorder %s25, 1
    %p106 = por %p104, %p105
    %p107 = scmp.ne.s32.totalorder %s98, %s99
    %p108 = scmp.eq.s32.totalorder %s25, 0
    %p109 = por %p107, %p108
    %p110 = scmp.ne.s32.totalorder %s98, %s99
    %p111 = scmp.eq.s32.totalorder %s26, 1
    %p112 = por %p110, %p111
    %p114 = scmp.ne.s32.totalorder %s99, %s113
    %p115 = scmp.eq.s32.totalorder %s26, 0
    %p116 = por %p114, %p115
    %s118 = sadd.s32 %s117, 1
    %p121 = scmp.eq.s32.totalorder %s20, 1
    %p122 = scmp.ne.s32.totalorder %s117, %s119
    %p123 = scmp.eq.s32.totalorder %s20, 0
    %p124 = por %p122, %p123
    %p125 = scmp.ne.s32.totalorder %s117, %s119
    %p126 = scmp.eq.s32.totalorder %s25, 1
    %p127 = por %p125, %p126
    %p128 = scmp.ne.s32.totalorder %s119, %s120
    %p129 = scmp.eq.s32.totalorder %s25, 0
    %p130 = por %p128, %p129
    %p131 = scmp.ne.s32.totalorder %s119, %s120
    %p132 = scmp.eq.s32.totalorder %s26, 1
    %p133 = por %p131, %p132
    %p135 = scmp.ne.s32.totalorder %s120, %s134
    %p136 = scmp.eq.s32.totalorder %s26, 0
    %p137 = por %p135, %p136
    %s139 = sadd.s32 %s138, 1
    %p142 = scmp.eq.s32.totalorder %s20, 1
    %p143 = scmp.ne.s32.totalorder %s138, %s140
    %p144 = scmp.eq.s32.totalorder %s20, 0
    %p145 = por %p143, %p144
    %p146 = scmp.ne.s32.totalorder %s138, %s140
    %p147 = scmp.eq.s32.totalorder %s25, 1
    %p148 = por %p146, %p147
    %p149 = scmp.ne.s32.totalorder %s140, %s141
    %p150 = scmp.eq.s32.totalorder %s25, 0
    %p151 = por %p149, %p150
    %p152 = scmp.ne.s32.totalorder %s140, %s141
    %p153 = scmp.eq.s32.totalorder %s26, 1
    %p154 = por %p152, %p153
    %p156 = scmp.ne.s32.totalorder %s141, %s155
    %p157 = scmp.eq.s32.totalorder %s26, 0
    %p158 = por %p156, %p157
    %s160 = sadd.s32 %s159, 1
    %p163 = scmp.eq.s32.totalorder %s20, 1
    %p164 = scmp.ne.s32.totalorder %s159, %s161
    %p165 = scmp.eq.s32.totalorder %s20, 0
    %p166 = por %p164, %p165
    %p167 = scmp.ne.s32.totalorder %s159, %s161
    %p168 = scmp.eq.s32.totalorder %s25, 1
    %p169 = por %p167, %p168
    %p170 = scmp.ne.s32.totalorder %s161, %s162
    %p171 = scmp.eq.s32.totalorder %s25, 0
    %p172 = por %p170, %p171
    %p173 = scmp.ne.s32.totalorder %s161, %s162
    %p174 = scmp.eq.s32.totalorder %s26, 1
    %p175 = por %p173, %p174
    %p177 = scmp.ne.s32.totalorder %s162, %s176
    %p178 = scmp.eq.s32.totalorder %s26, 0
    %p179 = por %p177, %p178
    %s181 = sadd.s32 %s180, 1
    %p184 = scmp.eq.s32.totalorder %s20, 1
    %p185 = scmp.ne.s32.totalorder %s180, %s182
    %p186 = scmp.eq.s32.totalorder %s20, 0
    %p187 = por %p185, %p186
    %p188 = scmp.ne.s32.totalorder %s180, %s182
    %p189 = scmp.eq.s32.totalorder %s25, 1
    %p190 = por %p188, %p189
    %p191 = scmp.ne.s32.totalorder %s182, %s183
    %p192 = scmp.eq.s32.totalorder %s25, 0
    %p193 = por %p191, %p192
    %p194 = scmp.ne.s32.totalorder %s182, %s183
    %p195 = scmp.eq.s32.totalorder %s26, 1
    %p196 = por %p194, %p195
    %p198 = scmp.ne.s32.totalorder %s183, %s197
    %p199 = scmp.eq.s32.totalorder %s26, 0
    %p200 = por %p198, %p199
    %s201 = ssub.s32 %s20, %s27
    %p202 = scmp.eq.s32.totalorder %s201, 0
    %s204 = sadd.s32 %s203, 1
    %s205 = scalar_select %p202, %s203, %s204
    %p208 = pneg %p202
    %p209 = scmp.eq.s32.totalorder %s20, 1
    %p210 = por %p208, %p209
    %p211 = scmp.ne.s32.totalorder %s203, %s206
    %p212 = scmp.eq.s32.totalorder %s20, 0
    %p213 = por %p211, %p212
    %p214 = scmp.ne.s32.totalorder %s203, %s206
    %p215 = scmp.eq.s32.totalorder %s25, 1
    %p216 = por %p214, %p215
    %p217 = scmp.ne.s32.totalorder %s206, %s207
    %p218 = scmp.eq.s32.totalorder %s25, 0
    %p219 = por %p217, %p218
    %p220 = scmp.ne.s32.totalorder %s206, %s207
    %p221 = scmp.eq.s32.totalorder %s26, 1
    %p222 = por %p220, %p221
    %p224 = scmp.ne.s32.totalorder %s207, %s223
    %p225 = scmp.eq.s32.totalorder %s26, 0
    %p226 = por %p224, %p225
    %s228 = sadd.s32 %s227, 1
    %p231 = scmp.eq.s32.totalorder %s20, 1
    %p232 = scmp.ne.s32.totalorder %s227, %s229
    %p233 = scmp.eq.s32.totalorder %s20, 0
    %p234 = por %p232, %p233
    %p235 = scmp.ne.s32.totalorder %s227, %s229
    %p236 = scmp.eq.s32.totalorder %s25, 1
    %p237 = por %p235, %p236
    %p238 = scmp.ne.s32.totalorder %s229, %s230
    %p239 = scmp.eq.s32.totalorder %s25, 0
    %p240 = por %p238, %p239
    %p241 = scmp.ne.s32.totalorder %s229, %s230
    %p242 = scmp.eq.s32.totalorder %s26, 1
    %p243 = por %p241, %p242
    %p245 = scmp.ne.s32.totalorder %s230, %s244
    %p246 = scmp.eq.s32.totalorder %s26, 0
    %p247 = por %p245, %p246
    %s249 = sadd.s32 %s248, 1
    %p252 = scmp.eq.s32.totalorder %s20, 1
    %p253 = scmp.ne.s32.totalorder %s248, %s250
    %p254 = scmp.eq.s32.totalorder %s20, 0
    %p255 = por %p253, %p254
    %p256 = scmp.ne.s32.totalorder %s248, %s250
    %p257 = scmp.eq.s32.totalorder %s25, 1
    %p258 = por %p256, %p257
    %p259 = scmp.ne.s32.totalorder %s250, %s251
    %p260 = scmp.eq.s32.totalorder %s25, 0
    %p261 = por %p259, %p260
    %p262 = scmp.ne.s32.totalorder %s250, %s251
    %p263 = scmp.eq.s32.totalorder %s26, 1
    %p264 = por %p262, %p263
    %p266 = scmp.ne.s32.totalorder %s251, %s265
    %p267 = scmp.eq.s32.totalorder %s26, 0
    %p268 = por %p266, %p267
    %s270 = sadd.s32 %s269, 1
    %p273 = scmp.eq.s32.totalorder %s20, 1
    %p274 = scmp.ne.s32.totalorder %s269, %s271
    %p275 = scmp.eq.s32.totalorder %s20, 0
    %p276 = por %p274, %p275
    %p277 = scmp.ne.s32.totalorder %s269, %s271
    %p278 = scmp.eq.s32.totalorder %s25, 1
    %p279 = por %p277, %p278
    %p280 = scmp.ne.s32.totalorder %s271, %s272
    %p281 = scmp.eq.s32.totalorder %s25, 0
    %p282 = por %p280, %p281
    %p283 = scmp.ne.s32.totalorder %s271, %s272
    %p284 = scmp.eq.s32.totalorder %s26, 1
    %p285 = por %p283, %p284
    %p287 = scmp.ne.s32.totalorder %s272, %s286
    %p288 = scmp.eq.s32.totalorder %s26, 0
    %p289 = por %p287, %p288
    %s291 = sadd.s32 %s290, 1
    %p294 = scmp.eq.s32.totalorder %s20, 1
    %p295 = scmp.ne.s32.totalorder %s290, %s292
    %p296 = scmp.eq.s32.totalorder %s20, 0
    %p297 = por %p295, %p296
    %p298 = scmp.ne.s32.totalorder %s290, %s292
    %p299 = scmp.eq.s32.totalorder %s25, 1
    %p300 = por %p298, %p299
    %p301 = scmp.ne.s32.totalorder %s292, %s293
    %p302 = scmp.eq.s32.totalorder %s25, 0
    %p303 = por %p301, %p302
    %p304 = scmp.ne.s32.totalorder %s292, %s293
    %p305 = scmp.eq.s32.totalorder %s26, 1
    %p306 = por %p304, %p305
    %p308 = scmp.ne.s32.totalorder %s293, %s307
    %p309 = scmp.eq.s32.totalorder %s26, 0
    %p310 = por %p308, %p309
    %s311 = ssub.s32 %s20, %s27
    %p312 = scmp.eq.s32.totalorder %s311, 0
    %s314 = sadd.s32 %s313, 1
    %s315 = scalar_select %p312, %s313, %s314
    %p318 = pneg %p312
    %p319 = scmp.eq.s32.totalorder %s20, 1
    %p320 = por %p318, %p319
    %p321 = scmp.ne.s32.totalorder %s313, %s316
    %p322 = scmp.eq.s32.totalorder %s20, 0
    %p323 = por %p321, %p322
    %p324 = scmp.ne.s32.totalorder %s313, %s316
    %p325 = scmp.eq.s32.totalorder %s25, 1
    %p326 = por %p324, %p325
    %p327 = scmp.ne.s32.totalorder %s316, %s317
    %p328 = scmp.eq.s32.totalorder %s25, 0
    %p329 = por %p327, %p328
    %p330 = scmp.ne.s32.totalorder %s316, %s317
    %p331 = scmp.eq.s32.totalorder %s26, 1
    %p332 = por %p330, %p331
    %p334 = scmp.ne.s32.totalorder %s317, %s333
    %p335 = scmp.eq.s32.totalorder %s26, 0
    %p336 = por %p334, %p335
    %p337 = scmp.le.s32.totalorder 1, %s20
    %p338 = scmp.lt.s32.totalorder %s20, 3
    %p339 = pnand %p337, %p338
    %p340 = pneg %p339
    // Predicated region
    $region9: #{tpu_custom_call.1} parent=5 // pred_check
      _
    $region10: #{tpu_custom_call.1} parent=5 // pred_check_branch
      %342 = sbr.rel (%p339) target = $region12
    $region11: #{tpu_custom_call.1} parent=5 // pred_region
      %s343 = ssub.s32 %s20, 1
      // Predicated region
      $region13: #{tpu_custom_call.1} parent=11 // pred_check
        %p344 = pneg %p41
      $region14: #{tpu_custom_call.1} parent=11 // pred_check_branch
        %346 = sbr.rel (%p344) target = $region16
      $region15: #{tpu_custom_call.1} parent=11 // pred_region
        _
      $region16: #{tpu_custom_call.1} parent=11 // pred_fallthru
        _
      // Predicated region
      $region17: #{tpu_custom_call.1} parent=11 // pred_check
        %p347 = pneg %p88
      $region18: #{tpu_custom_call.1} parent=11 // pred_check_branch
        %349 = sbr.rel (%p347) target = $region20
      $region19: #{tpu_custom_call.1} parent=11 // pred_region
        _
      $region20: #{tpu_custom_call.1} parent=11 // pred_fallthru
        _
      // Predicated region
      $region21: #{tpu_custom_call.1} parent=11 // pred_check
        %p350 = pneg %p109
      $region22: #{tpu_custom_call.1} parent=11 // pred_check_branch
        %352 = sbr.rel (%p350) target = $region24
      $region23: #{tpu_custom_call.1} parent=11 // pred_region
        _
      $region24: #{tpu_custom_call.1} parent=11 // pred_fallthru
        _
      // Predicated region
      $region25: #{tpu_custom_call.1} parent=11 // pred_check
        %p353 = pneg %p130
      $region26: #{tpu_custom_call.1} parent=11 // pred_check_branch
        %355 = sbr.rel (%p353) target = $region28
      $region27: #{tpu_custom_call.1} parent=11 // pred_region
        _
      $region28: #{tpu_custom_call.1} parent=11 // pred_fallthru
        _
      // Predicated region
      $region29: #{tpu_custom_call.1} parent=11 // pred_check
        %p356 = pneg %p151
      $region30: #{tpu_custom_call.1} parent=11 // pred_check_branch
        %358 = sbr.rel (%p356) target = $region32
      $region31: #{tpu_custom_call.1} parent=11 // pred_region
        _
      $region32: #{tpu_custom_call.1} parent=11 // pred_fallthru
        _
      // Predicated region
      $region33: #{tpu_custom_call.1} parent=11 // pred_check
        %p359 = pneg %p172
      $region34: #{tpu_custom_call.1} parent=11 // pred_check_branch
        %361 = sbr.rel (%p359) target = $region36
      $region35: #{tpu_custom_call.1} parent=11 // pred_region
        _
      $region36: #{tpu_custom_call.1} parent=11 // pred_fallthru
        _
      // Predicated region
      $region37: #{tpu_custom_call.1} parent=11 // pred_check
        %p362 = pneg %p193
      $region38: #{tpu_custom_call.1} parent=11 // pred_check_branch
        %364 = sbr.rel (%p362) target = $region40
      $region39: #{tpu_custom_call.1} parent=11 // pred_region
        _
      $region40: #{tpu_custom_call.1} parent=11 // pred_fallthru
        _
      // Predicated region
      $region41: #{tpu_custom_call.1} parent=11 // pred_check
        %p365 = pneg %p240
      $region42: #{tpu_custom_call.1} parent=11 // pred_check_branch
        %367 = sbr.rel (%p365) target = $region44
      $region43: #{tpu_custom_call.1} parent=11 // pred_region
        _
      $region44: #{tpu_custom_call.1} parent=11 // pred_fallthru
        _
      // Predicated region
      $region45: #{tpu_custom_call.1} parent=11 // pred_check
        %p368 = pneg %p261
      $region46: #{tpu_custom_call.1} parent=11 // pred_check_branch
        %370 = sbr.rel (%p368) target = $region48
      $region47: #{tpu_custom_call.1} parent=11 // pred_region
        _
      $region48: #{tpu_custom_call.1} parent=11 // pred_fallthru
        _
      // Predicated region
      $region49: #{tpu_custom_call.1} parent=11 // pred_check
        %p371 = pneg %p282
      $region50: #{tpu_custom_call.1} parent=11 // pred_check_branch
        %373 = sbr.rel (%p371) target = $region52
      $region51: #{tpu_custom_call.1} parent=11 // pred_region
        _
      $region52: #{tpu_custom_call.1} parent=11 // pred_fallthru
        _
      // Predicated region
      $region53: #{tpu_custom_call.1} parent=11 // pred_check
        %p374 = pneg %p303
      $region54: #{tpu_custom_call.1} parent=11 // pred_check_branch
        %376 = sbr.rel (%p374) target = $region56
      $region55: #{tpu_custom_call.1} parent=11 // pred_region
        _
      $region56: #{tpu_custom_call.1} parent=11 // pred_fallthru
        _
    $region12: #{tpu_custom_call.1} parent=5 // pred_fallthru
      _
    %p377 = scmp.lt.s32.totalorder %s20, 2
    // Predicated region
    $region57: #{tpu_custom_call.1} parent=5 // pred_check
      %p378 = pneg %p377
    $region58: #{tpu_custom_call.1} parent=5 // pred_check_branch
      %380 = sbr.rel (%p378) target = $region60
    $region59: #{tpu_custom_call.1} parent=5 // pred_region
      // Predicated region
      $region61: #{tpu_custom_call.1} parent=59 // pred_check
        %p381 = pneg %p61
      $region62: #{tpu_custom_call.1} parent=59 // pred_check_branch
        %383 = sbr.rel (%p381) target = $region64
      $region63: #{tpu_custom_call.1} parent=59 // pred_region
        %p384 = scmp.lt.s32.totalorder %s20, 1
        %s385 = scalar_select %p384, %s20, 1
        %s386 = smul.addr %s385, 3
        %s387 = smul.addr %s386, 2
        %s388 = scalar_lea.vmem %s1, %s387
      $region64: #{tpu_custom_call.1} parent=59 // pred_fallthru
        _
      // Predicated region
      $region65: #{tpu_custom_call.1} parent=59 // pred_check
        %p389 = pneg %p213
      $region66: #{tpu_custom_call.1} parent=59 // pred_check_branch
        %391 = sbr.rel (%p389) target = $region68
      $region67: #{tpu_custom_call.1} parent=59 // pred_region
        %p392 = scmp.lt.s32.totalorder %s20, 1
        %s393 = scalar_select %p392, %s20, 1
        %s394 = smul.addr %s393, 2
        %s395 = smul.addr %s394, 8
        %s396 = scalar_lea.vmem %s8, %s395
      $region68: #{tpu_custom_call.1} parent=59 // pred_fallthru
        _
    $region60: #{tpu_custom_call.1} parent=5 // pred_fallthru
      _
    %p397 = scmp.le.s32.totalorder 1, %s20
    %p398 = scmp.lt.s32.totalorder %s20, 3
    %p399 = pnand %p397, %p398
    %p400 = pneg %p399
    // Predicated region
    $region69: #{tpu_custom_call.1} parent=5 // pred_check
      _
    $region70: #{tpu_custom_call.1} parent=5 // pred_check_branch
      %402 = sbr.rel (%p399) target = $region72
    $region71: #{tpu_custom_call.1} parent=5 // pred_region
      %s403 = ssub.s32 %s20, 1
      %p404 = pneg %p41
      %p405 = pneg %p38
      %p406 = scmp.lt.s32.totalorder %s25, 1
      %s407 = scalar_select %p406, %s25, 1
      %s408 = smul.addr %s407, 3
      %s409 = smul.addr %s408, 2
      %s410 = scalar_lea.vmem %s1, %s409
      %p411 = pneg %p67
      %p412 = pneg %p64
      %p413 = pneg %p88
      %p414 = pneg %p85
      %p415 = pneg %p109
      %p416 = pneg %p106
      %p417 = pneg %p130
      %p418 = pneg %p127
      %p419 = pneg %p151
      %p420 = pneg %p148
      %p421 = pneg %p172
      %p422 = pneg %p169
      %p423 = pneg %p193
      %p424 = pneg %p190
      %p425 = scmp.lt.s32.totalorder %s25, 1
      %s426 = scalar_select %p425, %s25, 1
      %s427 = smul.addr %s426, 2
      %s428 = smul.addr %s427, 8
      %s429 = scalar_lea.vmem %s8, %s428
      %p430 = pneg %p219
      %p431 = pneg %p216
      %p432 = pneg %p240
      %p433 = pneg %p237
      %p434 = pneg %p261
      %p435 = pneg %p258
      %p436 = pneg %p282
      %p437 = pneg %p279
      %p438 = pneg %p303
      %p439 = pneg %p300
      %p440 = pneg %p329
      %p441 = pneg %p326
      %p442 = scmp.lt.s32.totalorder %s25, 1
      %s443 = scalar_select %p442, %s25, 1
      %s444 = smul.addr %s443, 4
      %s445 = scalar_lea.vmem %s13, %s444
      %p446 = scmp.lt.s32.totalorder %s25, 1
      %s447 = scalar_select %p446, %s25, 1
      %s448 = smul.addr %s447, 3
      %s449 = smul.addr %s448, 2
      %s450 = scalar_lea.vmem %s1, %s449
      %p451 = scmp.lt.s32.totalorder %s25, 1
      %s452 = scalar_select %p451, %s25, 1
      %s453 = smul.addr %s452, 2
      %s454 = smul.addr %s453, 8
      %s455 = scalar_lea.vmem %s8, %s454
      %p456 = scmp.lt.s32.totalorder %s25, 1
      %s457 = scalar_select %p456, %s25, 1
      %s458 = smul.addr %s457, 4
      %s459 = scalar_lea.vmem %s13, %s458
      %v461 = vld [vmem:[%s2] sm:$0x3]
      %v462 = vld [vmem:[%s450] sm:$0xf]
      %v465 = vunpack.c.l.s4 1966171168
      %v466 = vunpack.c.0.s8 %v465
      %v467 = vlaneseq
      %v468 = vshrl.u32 %v467, 7
      %v469 = vsub.s32 %v466, %v468
      %v470 = vrot.slane %v461, %v469
      %v471 = vcombine.high %v470, %v470
      %v473 = vunpack.c.l.s4 1966171168
      %v474 = vunpack.c.0.s8 %v473
      %v475 = vlaneseq
      %v476 = vshrl.u32 %v475, 7
      %v477 = vsub.s32 %v474, %v476
      %v478 = vrot.slane %v470, %v477
      %v480 = vunpack.c.l.s4 1966171168
      %v481 = vunpack.c.0.s8 %v480
      %v482 = vlaneseq
      %v483 = vshrl.u32 %v482, 7
      %v484 = vsub.s32 %v481, %v483
      %v485 = vrot.slane %v471, %v484
      %v487 = vpack.i.b16 %v478, %v478
      %v489 = vlaneseq
      %v490 = vshrl.u32 %v489, 7
      %v491 = vsub.s32 0, %v490
      %v492 = vrot.slane %v487, %v491
      %v494 = vpack.i.b16 %v485, %v485
      %v496 = vlaneseq
      %v497 = vshrl.u32 %v496, 7
      %v498 = vsub.s32 0, %v497
      %v499 = vrot.slane %v494, %v498
      %v502 = vcombine.low %v492, %v499
      %v504 = vunpack.c.l.s4 1983009808
      %v505 = vunpack.c.0.s8 %v504
      %v506 = vlaneseq
      %v507 = vshrl.u32 %v506, 7
      %v508 = vsub.s32 %v505, %v507
      %v509 = vrot.slane %v502, %v508
      %v511 = vmul.bf16 %v462, %v509
      %v512 = vld [vmem:[%s3] sm:$0x3]
      %v513 = vld [vmem:[%s450] sm:$0x3f]
      %s514 = scalar_lea.vmem %s3, 2
      %v515 = vld [vmem:[%s514] sm:$0x3]
      %v517 = vcombine.high %v513, %v513
      %v519 = vunpack.c.l.s4 1983009808
      %v520 = vunpack.c.0.s8 %v519
      %v521 = vlaneseq
      %v522 = vshrl.u32 %v521, 7
      %v523 = vsub.s32 %v520, %v522
      %v524 = vrot.slane %v513, %v523
      %v526 = vunpack.c.l.s4 1983009808
      %v527 = vunpack.c.0.s8 %v526
      %v528 = vlaneseq
      %v529 = vshrl.u32 %v528, 7
      %v530 = vsub.s32 %v527, %v529
      %v531 = vrot.slane %v517, %v530
      %v532 = vcombine.high %v524, %v524
      %533 = vrot.lane.b32.xlu0 %v524, 127
      %v534 = vpop.permute.xlu0 %533
      %535 = vrot.lane.b32.xlu0 %v532, 127
      %v536 = vpop.permute.xlu0 %535
      %537 = vrot.lane.b32.xlu0 %v531, 127
      %v538 = vpop.permute.xlu0 %537
      %vm539 = vcmask 1039360
      %v540 = vsel %vm539, %v534, %v536
      %v541 = vsel %vm539, %v536, %v538
      %vm542 = vcmask 23552
      %v544 = vsel %vm542, %v515, 0
      %vm546 = vcmask 1040384
      %vm547 = vcmask 1041408
      %v548 = vsel %vm546, 4294967295, 65535
      %v549 = vsel %vm547, %v548, 0
      %v551 = vand.u32 %v540, %v549
      %v554 = vand.u32 %v541, %v549
      %556 = vmatprep.subr.bf16.mxu0 %v554
      %557 = vmatpush1.bf16.msra.mxu0 %v551
      %558 = vmatprep.subr.bf16.mxu0 0
      %559 = vmatpush1.bf16.msra.mxu0 0
      %560 = vmatprep.subr.bf16.mxu0 0
      %561 = vmatpush1.bf16.msra.mxu0 0
      %562 = vmatprep.subr.bf16.mxu0 0
      %563 = vmatpush1.bf16.msra.mxu0 0
      %564 = vmatprep.subr.bf16.mxu0 0
      %565 = vmatpush1.bf16.msra.mxu0 0
      %566 = vmatprep.subr.bf16.mxu0 0
      %567 = vmatpush1.bf16.msra.mxu0 0
      %568 = vmatprep.subr.bf16.mxu0 0
      %569 = vmatpush1.bf16.msra.mxu0 0
      %570 = vmatprep.subr.bf16.mxu0 0
      %571 = vmatpush1.bf16.msra.mxu0 0
      %572 = vmatprep.subr.bf16.mxu0 0
      %573 = vmatpush1.bf16.msra.mxu0 0
      %574 = vmatprep.subr.bf16.mxu0 0
      %575 = vmatpush1.bf16.msra.mxu0 0
      %576 = vmatprep.subr.bf16.mxu0 0
      %577 = vmatpush1.bf16.msra.mxu0 0
      %578 = vmatprep.subr.bf16.mxu0 0
      %579 = vmatpush1.bf16.msra.mxu0 0
      %580 = vmatprep.subr.bf16.mxu0 0
      %581 = vmatpush1.bf16.msra.mxu0 0
      %582 = vmatprep.subr.bf16.mxu0 0
      %583 = vmatpush1.bf16.msra.mxu0 0
      %584 = vmatprep.subr.bf16.mxu0 0
      %585 = vmatpush1.bf16.msra.mxu0 0
      %586 = vmatprep.subr.bf16.mxu0 0
      %587 = vmatpush1.bf16.msra.mxu0 0
      %588 = vmatprep.mubr.bf16.mxu0 0
      %589 = vmatmul.mubr.bf16.gmra.mrb[0].mxu0 %v544
      %v590 = vpop.f32.mrb[0].mxu0
      %v591 = vadd.f32 0.0, %v590
      %v592 = vpop.f32.mrb[0].mxu0
      %v593 = vadd.f32 0.0, %v592
      %v594 = vpop.f32.mrb[0].mxu0
      %v595 = vpop.f32.mrb[0].mxu0
      %596 = vdwg.mxu0
      %v599 = vunpack.c.l.s4 1983009808
      %v600 = vunpack.c.0.s8 %v599
      %v601 = vlaneseq
      %v602 = vshrl.u32 %v601, 7
      %v603 = vsub.s32 %v600, %v602
      %v604 = vrot.slane %v511, %v603
      %v605 = vcombine.high %v604, %v604
      %v607 = vsel %vm542, %v512, 0
      %v610 = vand.u32 %v604, %v549
      %v613 = vand.u32 %v605, %v549
      %615 = vmatprep.subr.bf16.mxu0 %v613
      %616 = vmatpush1.bf16.msra.mxu0 %v610
      %617 = vmatprep.subr.bf16.mxu0 0
      %618 = vmatpush1.bf16.msra.mxu0 0
      %619 = vmatprep.subr.bf16.mxu0 0
      %620 = vmatpush1.bf16.msra.mxu0 0
      %621 = vmatprep.subr.bf16.mxu0 0
      %622 = vmatpush1.bf16.msra.mxu0 0
      %623 = vmatprep.subr.bf16.mxu0 0
      %624 = vmatpush1.bf16.msra.mxu0 0
      %625 = vmatprep.subr.bf16.mxu0 0
      %626 = vmatpush1.bf16.msra.mxu0 0
      %627 = vmatprep.subr.bf16.mxu0 0
      %628 = vmatpush1.bf16.msra.mxu0 0
      %629 = vmatprep.subr.bf16.mxu0 0
      %630 = vmatpush1.bf16.msra.mxu0 0
      %631 = vmatprep.subr.bf16.mxu0 0
      %632 = vmatpush1.bf16.msra.mxu0 0
      %633 = vmatprep.subr.bf16.mxu0 0
      %634 = vmatpush1.bf16.msra.mxu0 0
      %635 = vmatprep.subr.bf16.mxu0 0
      %636 = vmatpush1.bf16.msra.mxu0 0
      %637 = vmatprep.subr.bf16.mxu0 0
      %638 = vmatpush1.bf16.msra.mxu0 0
      %639 = vmatprep.subr.bf16.mxu0 0
      %640 = vmatpush1.bf16.msra.mxu0 0
      %641 = vmatprep.subr.bf16.mxu0 0
      %642 = vmatpush1.bf16.msra.mxu0 0
      %643 = vmatprep.subr.bf16.mxu0 0
      %644 = vmatpush1.bf16.msra.mxu0 0
      %645 = vmatprep.subr.bf16.mxu0 0
      %646 = vmatpush1.bf16.msra.mxu0 0
      %647 = vmatprep.mubr.bf16.mxu0 0
      %648 = vmatmul.mubr.bf16.gmra.mrb[0].mxu0 %v607
      %v649 = vpop.f32.mrb[0].mxu0
      %v650 = vadd.f32 %v591, %v649
      %v651 = vpop.f32.mrb[0].mxu0
      %v652 = vadd.f32 %v593, %v651
      %v653 = vpop.f32.mrb[0].mxu0
      %v654 = vpop.f32.mrb[0].mxu0
      %655 = vdwg.mxu0
      %v656 = vld [vmem:[%s450] sm:$0x3f]
      %v657 = vshrl.u32 %v478, 16
      %v658 = vpack.i.b16 %v657, %v657
      %v660 = vlaneseq
      %v661 = vshrl.u32 %v660, 7
      %v662 = vsub.s32 0, %v661
      %v663 = vrot.slane %v658, %v662
      %v664 = vshrl.u32 %v485, 16
      %v665 = vpack.i.b16 %v664, %v664
      %v667 = vlaneseq
      %v668 = vshrl.u32 %v667, 7
      %v669 = vsub.s32 0, %v668
      %v670 = vrot.slane %v665, %v669
      %v673 = vcombine.low %v663, %v670
      %v675 = vunpack.c.l.s4 1983009808
      %v676 = vunpack.c.0.s8 %v675
      %v677 = vlaneseq
      %v678 = vshrl.u32 %v677, 7
      %v679 = vsub.s32 %v676, %v678
      %v680 = vrot.slane %v673, %v679
      %681 = vrot.lane.b32.xlu0 %v680, 2
      %v682 = vpop.permute.xlu0 %681
      %v683 = vrot.slane %v682, 6
      %vm684 = vcmask 15360
      %v685 = vsel %vm684, %v683, %v682
      %v687 = vmul.bf16 %v656, %v685
      %s688 = scalar_lea.vmem %s3, 4
      %v689 = vld [vmem:[%s688] sm:$0x3]
      %v691 = vcombine.high %v687, %v687
      %v693 = vunpack.c.l.s4 1983009808
      %v694 = vunpack.c.0.s8 %v693
      %v695 = vlaneseq
      %v696 = vshrl.u32 %v695, 7
      %v697 = vsub.s32 %v694, %v696
      %v698 = vrot.slane %v687, %v697
      %v700 = vunpack.c.l.s4 1983009808
      %v701 = vunpack.c.0.s8 %v700
      %v702 = vlaneseq
      %v703 = vshrl.u32 %v702, 7
      %v704 = vsub.s32 %v701, %v703
      %v705 = vrot.slane %v691, %v704
      %v706 = vcombine.high %v698, %v698
      %707 = vrot.lane.b32.xlu0 %v698, 126
      %v708 = vpop.permute.xlu0 %707
      %709 = vrot.lane.b32.xlu0 %v706, 126
      %v710 = vpop.permute.xlu0 %709
      %711 = vrot.lane.b32.xlu0 %v705, 126
      %v712 = vpop.permute.xlu0 %711
      %vm713 = vcmask 1031168
      %v714 = vsel %vm713, %v708, %v710
      %v715 = vsel %vm713, %v710, %v712
      %v717 = vsel %vm542, %v689, 0
      %v720 = vand.u32 %v714, %v549
      %v723 = vand.u32 %v715, %v549
      %725 = vmatprep.subr.bf16.mxu0 %v723
      %726 = vmatpush1.bf16.msra.mxu0 %v720
      %727 = vmatprep.subr.bf16.mxu0 0
      %728 = vmatpush1.bf16.msra.mxu0 0
      %729 = vmatprep.subr.bf16.mxu0 0
      %730 = vmatpush1.bf16.msra.mxu0 0
      %731 = vmatprep.subr.bf16.mxu0 0
      %732 = vmatpush1.bf16.msra.mxu0 0
      %733 = vmatprep.subr.bf16.mxu0 0
      %734 = vmatpush1.bf16.msra.mxu0 0
      %735 = vmatprep.subr.bf16.mxu0 0
      %736 = vmatpush1.bf16.msra.mxu0 0
      %737 = vmatprep.subr.bf16.mxu0 0
      %738 = vmatpush1.bf16.msra.mxu0 0
      %739 = vmatprep.subr.bf16.mxu0 0
      %740 = vmatpush1.bf16.msra.mxu0 0
      %741 = vmatprep.subr.bf16.mxu0 0
      %742 = vmatpush1.bf16.msra.mxu0 0
      %743 = vmatprep.subr.bf16.mxu0 0
      %744 = vmatpush1.bf16.msra.mxu0 0
      %745 = vmatprep.subr.bf16.mxu0 0
      %746 = vmatpush1.bf16.msra.mxu0 0
      %747 = vmatprep.subr.bf16.mxu0 0
      %748 = vmatpush1.bf16.msra.mxu0 0
      %749 = vmatprep.subr.bf16.mxu0 0
      %750 = vmatpush1.bf16.msra.mxu0 0
      %751 = vmatprep.subr.bf16.mxu0 0
      %752 = vmatpush1.bf16.msra.mxu0 0
      %753 = vmatprep.subr.bf16.mxu0 0
      %754 = vmatpush1.bf16.msra.mxu0 0
      %755 = vmatprep.subr.bf16.mxu0 0
      %756 = vmatpush1.bf16.msra.mxu0 0
      %757 = vmatprep.mubr.bf16.mxu0 0
      %758 = vmatmul.mubr.bf16.gmra.mrb[0].mxu0 %v717
      %v759 = vpop.f32.mrb[0].mxu0
      %v760 = vadd.f32 0.0, %v759
      %v761 = vpop.f32.mrb[0].mxu0
      %v762 = vadd.f32 0.0, %v761
      %v763 = vpop.f32.mrb[0].mxu0
      %v764 = vpop.f32.mrb[0].mxu0
      %765 = vdwg.mxu0
      %v766 = vadd.f32 %v650, %v760
      %v767 = vadd.f32 %v652, %v762
      %v768 = vld [vmem:[%s450] sm:$0x3f]
      %769 = vrot.lane.b32.xlu0 %v509, 16
      %v770 = vpop.permute.xlu0 %769
      %v771 = vrot.slane %v770, 6
      %vm772 = vcmask 130048
      %v773 = vsel %vm772, %v771, %v770
      %v775 = vmul.bf16 %v768, %v773
      %s776 = scalar_lea.vmem %s3, 6
      %v777 = vld [vmem:[%s776] sm:$0x3]
      %v779 = vcombine.high %v775, %v775
      %v781 = vunpack.c.l.s4 1983009808
      %v782 = vunpack.c.0.s8 %v781
      %v783 = vlaneseq
      %v784 = vshrl.u32 %v783, 7
      %v785 = vsub.s32 %v782, %v784
      %v786 = vrot.slane %v775, %v785
      %v788 = vunpack.c.l.s4 1983009808
      %v789 = vunpack.c.0.s8 %v788
      %v790 = vlaneseq
      %v791 = vshrl.u32 %v790, 7
      %v792 = vsub.s32 %v789, %v791
      %v793 = vrot.slane %v779, %v792
      %v794 = vcombine.high %v786, %v786
      %795 = vrot.lane.b32.xlu0 %v786, 112
      %v796 = vpop.permute.xlu0 %795
      %797 = vrot.lane.b32.xlu0 %v794, 112
      %v798 = vpop.permute.xlu0 %797
      %799 = vrot.lane.b32.xlu0 %v793, 112
      %v800 = vpop.permute.xlu0 %799
      %vm801 = vcmask 916480
      %v802 = vsel %vm801, %v796, %v798
      %v803 = vsel %vm801, %v798, %v800
      %v805 = vsel %vm542, %v777, 0
      %v808 = vand.u32 %v802, %v549
      %v811 = vand.u32 %v803, %v549
      %813 = vmatprep.subr.bf16.mxu0 %v811
      %814 = vmatpush1.bf16.msra.mxu0 %v808
      %815 = vmatprep.subr.bf16.mxu0 0
      %816 = vmatpush1.bf16.msra.mxu0 0
      %817 = vmatprep.subr.bf16.mxu0 0
      %818 = vmatpush1.bf16.msra.mxu0 0
      %819 = vmatprep.subr.bf16.mxu0 0
      %820 = vmatpush1.bf16.msra.mxu0 0
      %821 = vmatprep.subr.bf16.mxu0 0
      %822 = vmatpush1.bf16.msra.mxu0 0
      %823 = vmatprep.subr.bf16.mxu0 0
      %824 = vmatpush1.bf16.msra.mxu0 0
      %825 = vmatprep.subr.bf16.mxu0 0
      %826 = vmatpush1.bf16.msra.mxu0 0
      %827 = vmatprep.subr.bf16.mxu0 0
      %828 = vmatpush1.bf16.msra.mxu0 0
      %829 = vmatprep.subr.bf16.mxu0 0
      %830 = vmatpush1.bf16.msra.mxu0 0
      %831 = vmatprep.subr.bf16.mxu0 0
      %832 = vmatpush1.bf16.msra.mxu0 0
      %833 = vmatprep.subr.bf16.mxu0 0
      %834 = vmatpush1.bf16.msra.mxu0 0
      %835 = vmatprep.subr.bf16.mxu0 0
      %836 = vmatpush1.bf16.msra.mxu0 0
      %837 = vmatprep.subr.bf16.mxu0 0
      %838 = vmatpush1.bf16.msra.mxu0 0
      %839 = vmatprep.subr.bf16.mxu0 0
      %840 = vmatpush1.bf16.msra.mxu0 0
      %841 = vmatprep.subr.bf16.mxu0 0
      %842 = vmatpush1.bf16.msra.mxu0 0
      %843 = vmatprep.subr.bf16.mxu0 0
      %844 = vmatpush1.bf16.msra.mxu0 0
      %845 = vmatprep.mubr.bf16.mxu0 0
      %846 = vmatmul.mubr.bf16.gmra.mrb[0].mxu0 %v805
      %v847 = vpop.f32.mrb[0].mxu0
      %v848 = vadd.f32 0.0, %v847
      %v849 = vpop.f32.mrb[0].mxu0
      %v850 = vadd.f32 0.0, %v849
      %v851 = vpop.f32.mrb[0].mxu0
      %v852 = vpop.f32.mrb[0].mxu0
      %853 = vdwg.mxu0
      %v854 = vadd.f32 %v766, %v848
      %v855 = vadd.f32 %v767, %v850
      %v856 = vld [vmem:[%s450] sm:$0x3f]
      %s857 = scalar_lea.vmem %s3, 8
      %v858 = vld [vmem:[%s857] sm:$0x3]
      %v860 = vcombine.high %v856, %v856
      %v862 = vunpack.c.l.s4 1983009808
      %v863 = vunpack.c.0.s8 %v862
      %v864 = vlaneseq
      %v865 = vshrl.u32 %v864, 7
      %v866 = vsub.s32 %v863, %v865
      %v867 = vrot.slane %v856, %v866
      %v869 = vunpack.c.l.s4 1983009808
      %v870 = vunpack.c.0.s8 %v869
      %v871 = vlaneseq
      %v872 = vshrl.u32 %v871, 7
      %v873 = vsub.s32 %v870, %v872
      %v874 = vrot.slane %v860, %v873
      %v875 = vcombine.high %v867, %v867
      %876 = vrot.lane.b32.xlu0 %v867, 111
      %v877 = vpop.permute.xlu0 %876
      %878 = vrot.lane.b32.xlu0 %v875, 111
      %v879 = vpop.permute.xlu0 %878
      %880 = vrot.lane.b32.xlu0 %v874, 111
      %v881 = vpop.permute.xlu0 %880
      %vm882 = vcmask 908288
      %v883 = vsel %vm882, %v877, %v879
      %v884 = vsel %vm882, %v879, %v881
      %v886 = vsel %vm542, %v858, 0
      %v889 = vand.u32 %v883, %v549
      %v892 = vand.u32 %v884, %v549
      %894 = vmatprep.subr.bf16.mxu0 %v892
      %895 = vmatpush1.bf16.msra.mxu0 %v889
      %896 = vmatprep.subr.bf16.mxu0 0
      %897 = vmatpush1.bf16.msra.mxu0 0
      %898 = vmatprep.subr.bf16.mxu0 0
      %899 = vmatpush1.bf16.msra.mxu0 0
      %900 = vmatprep.subr.bf16.mxu0 0
      %901 = vmatpush1.bf16.msra.mxu0 0
      %902 = vmatprep.subr.bf16.mxu0 0
      %903 = vmatpush1.bf16.msra.mxu0 0
      %904 = vmatprep.subr.bf16.mxu0 0
      %905 = vmatpush1.bf16.msra.mxu0 0
      %906 = vmatprep.subr.bf16.mxu0 0
      %907 = vmatpush1.bf16.msra.mxu0 0
      %908 = vmatprep.subr.bf16.mxu0 0
      %909 = vmatpush1.bf16.msra.mxu0 0
      %910 = vmatprep.subr.bf16.mxu0 0
      %911 = vmatpush1.bf16.msra.mxu0 0
      %912 = vmatprep.subr.bf16.mxu0 0
      %913 = vmatpush1.bf16.msra.mxu0 0
      %914 = vmatprep.subr.bf16.mxu0 0
      %915 = vmatpush1.bf16.msra.mxu0 0
      %916 = vmatprep.subr.bf16.mxu0 0
      %917 = vmatpush1.bf16.msra.mxu0 0
      %918 = vmatprep.subr.bf16.mxu0 0
      %919 = vmatpush1.bf16.msra.mxu0 0
      %920 = vmatprep.subr.bf16.mxu0 0
      %921 = vmatpush1.bf16.msra.mxu0 0
      %922 = vmatprep.subr.bf16.mxu0 0
      %923 = vmatpush1.bf16.msra.mxu0 0
      %924 = vmatprep.subr.bf16.mxu0 0
      %925 = vmatpush1.bf16.msra.mxu0 0
      %926 = vmatprep.mubr.bf16.mxu0 0
      %927 = vmatmul.mubr.bf16.gmra.mrb[0].mxu0 %v886
      %v928 = vpop.f32.mrb[0].mxu0
      %v929 = vadd.f32 0.0, %v928
      %v930 = vpop.f32.mrb[0].mxu0
      %v931 = vadd.f32 0.0, %v930
      %v932 = vpop.f32.mrb[0].mxu0
      %v933 = vpop.f32.mrb[0].mxu0
      %934 = vdwg.mxu0
      %v935 = vadd.f32 %v854, %v929
      %v936 = vadd.f32 %v855, %v931
      %v937 = vld [vmem:[%s450] sm:$0x3f]
      %938 = vrot.lane.b32.xlu0 %v680, 18
      %v939 = vpop.permute.xlu0 %938
      %v940 = vrot.slane %v939, 6
      %vm941 = vcmask 146432
      %v942 = vsel %vm941, %v940, %v939
      %v944 = vmul.bf16 %v937, %v942
      %s945 = scalar_lea.vmem %s3, 10
      %v946 = vld [vmem:[%s945] sm:$0x3]
      %v948 = vcombine.high %v944, %v944
      %v950 = vunpack.c.l.s4 1983009808
      %v951 = vunpack.c.0.s8 %v950
      %v952 = vlaneseq
      %v953 = vshrl.u32 %v952, 7
      %v954 = vsub.s32 %v951, %v953
      %v955 = vrot.slane %v944, %v954
      %v957 = vunpack.c.l.s4 1983009808
      %v958 = vunpack.c.0.s8 %v957
      %v959 = vlaneseq
      %v960 = vshrl.u32 %v959, 7
      %v961 = vsub.s32 %v958, %v960
      %v962 = vrot.slane %v948, %v961
      %v963 = vcombine.high %v955, %v955
      %964 = vrot.lane.b32.xlu0 %v955, 110
      %v965 = vpop.permute.xlu0 %964
      %966 = vrot.lane.b32.xlu0 %v963, 110
      %v967 = vpop.permute.xlu0 %966
      %968 = vrot.lane.b32.xlu0 %v962, 110
      %v969 = vpop.permute.xlu0 %968
      %vm970 = vcmask 900096
      %v971 = vsel %vm970, %v965, %v967
      %v972 = vsel %vm970, %v967, %v969
      %v974 = vsel %vm542, %v946, 0
      %v977 = vand.u32 %v971, %v549
      %v980 = vand.u32 %v972, %v549
      %982 = vmatprep.subr.bf16.mxu0 %v980
      %983 = vmatpush1.bf16.msra.mxu0 %v977
      %984 = vmatprep.subr.bf16.mxu0 0
      %985 = vmatpush1.bf16.msra.mxu0 0
      %986 = vmatprep.subr.bf16.mxu0 0
      %987 = vmatpush1.bf16.msra.mxu0 0
      %988 = vmatprep.subr.bf16.mxu0 0
      %989 = vmatpush1.bf16.msra.mxu0 0
      %990 = vmatprep.subr.bf16.mxu0 0
      %991 = vmatpush1.bf16.msra.mxu0 0
      %992 = vmatprep.subr.bf16.mxu0 0
      %993 = vmatpush1.bf16.msra.mxu0 0
      %994 = vmatprep.subr.bf16.mxu0 0
      %995 = vmatpush1.bf16.msra.mxu0 0
      %996 = vmatprep.subr.bf16.mxu0 0
      %997 = vmatpush1.bf16.msra.mxu0 0
      %998 = vmatprep.subr.bf16.mxu0 0
      %999 = vmatpush1.bf16.msra.mxu0 0
      %1000 = vmatprep.subr.bf16.mxu0 0
      %1001 = vmatpush1.bf16.msra.mxu0 0
      %1002 = vmatprep.subr.bf16.mxu0 0
      %1003 = vmatpush1.bf16.msra.mxu0 0
      %1004 = vmatprep.subr.bf16.mxu0 0
      %1005 = vmatpush1.bf16.msra.mxu0 0
      %1006 = vmatprep.subr.bf16.mxu0 0
      %1007 = vmatpush1.bf16.msra.mxu0 0
      %1008 = vmatprep.subr.bf16.mxu0 0
      %1009 = vmatpush1.bf16.msra.mxu0 0
      %1010 = vmatprep.subr.bf16.mxu0 0
      %1011 = vmatpush1.bf16.msra.mxu0 0
      %1012 = vmatprep.subr.bf16.mxu0 0
      %1013 = vmatpush1.bf16.msra.mxu0 0
      %1014 = vmatprep.mubr.bf16.mxu0 0
      %1015 = vmatmul.mubr.bf16.gmra.mrb[0].mxu0 %v974
      %v1016 = vpop.f32.mrb[0].mxu0
      %v1017 = vadd.f32 0.0, %v1016
      %v1018 = vpop.f32.mrb[0].mxu0
      %v1019 = vadd.f32 0.0, %v1018
      %v1020 = vpop.f32.mrb[0].mxu0
      %v1021 = vpop.f32.mrb[0].mxu0
      %1022 = vdwg.mxu0
      %v1023 = vadd.f32 %v935, %v1017
      %v1024 = vadd.f32 %v936, %v1019
      %v1025 = vld [vmem:[%s450] sm:$0x3f]
      %1026 = vrot.lane.b32.xlu0 %v509, 32
      %v1027 = vpop.permute.xlu0 %1026
      %v1028 = vrot.slane %v1027, 6
      %vm1029 = vcmask 261120
      %v1030 = vsel %vm1029, %v1028, %v1027
      %v1032 = vmul.bf16 %v1025, %v1030
      %s1033 = scalar_lea.vmem %s3, 12
      %v1034 = vld [vmem:[%s1033] sm:$0x3]
      %v1036 = vcombine.high %v1032, %v1032
      %v1038 = vunpack.c.l.s4 1983009808
      %v1039 = vunpack.c.0.s8 %v1038
      %v1040 = vlaneseq
      %v1041 = vshrl.u32 %v1040, 7
      %v1042 = vsub.s32 %v1039, %v1041
      %v1043 = vrot.slane %v1032, %v1042
      %v1045 = vunpack.c.l.s4 1983009808
      %v1046 = vunpack.c.0.s8 %v1045
      %v1047 = vlaneseq
      %v1048 = vshrl.u32 %v1047, 7
      %v1049 = vsub.s32 %v1046, %v1048
      %v1050 = vrot.slane %v1036, %v1049
      %v1051 = vcombine.high %v1043, %v1043
      %1052 = vrot.lane.b32.xlu0 %v1043, 96
      %v1053 = vpop.permute.xlu0 %1052
      %1054 = vrot.lane.b32.xlu0 %v1051, 96
      %v1055 = vpop.permute.xlu0 %1054
      %1056 = vrot.lane.b32.xlu0 %v1050, 96
      %v1057 = vpop.permute.xlu0 %1056
      %vm1058 = vcmask 785408
      %v1059 = vsel %vm1058, %v1053, %v1055
      %v1060 = vsel %vm1058, %v1055, %v1057
      %v1062 = vsel %vm542, %v1034, 0
      %v1065 = vand.u32 %v1059, %v549
      %v1068 = vand.u32 %v1060, %v549
      %1070 = vmatprep.subr.bf16.mxu0 %v1068
      %1071 = vmatpush1.bf16.msra.mxu0 %v1065
      %1072 = vmatprep.subr.bf16.mxu0 0
      %1073 = vmatpush1.bf16.msra.mxu0 0
      %1074 = vmatprep.subr.bf16.mxu0 0
      %1075 = vmatpush1.bf16.msra.mxu0 0
      %1076 = vmatprep.subr.bf16.mxu0 0
      %1077 = vmatpush1.bf16.msra.mxu0 0
      %1078 = vmatprep.subr.bf16.mxu0 0
      %1079 = vmatpush1.bf16.msra.mxu0 0
      %1080 = vmatprep.subr.bf16.mxu0 0
      %1081 = vmatpush1.bf16.msra.mxu0 0
      %1082 = vmatprep.subr.bf16.mxu0 0
      %1083 = vmatpush1.bf16.msra.mxu0 0
      %1084 = vmatprep.subr.bf16.mxu0 0
      %1085 = vmatpush1.bf16.msra.mxu0 0
      %1086 = vmatprep.subr.bf16.mxu0 0
      %1087 = vmatpush1.bf16.msra.mxu0 0
      %1088 = vmatprep.subr.bf16.mxu0 0
      %1089 = vmatpush1.bf16.msra.mxu0 0
      %1090 = vmatprep.subr.bf16.mxu0 0
      %1091 = vmatpush1.bf16.msra.mxu0 0
      %1092 = vmatprep.subr.bf16.mxu0 0
      %1093 = vmatpush1.bf16.msra.mxu0 0
      %1094 = vmatprep.subr.bf16.mxu0 0
      %1095 = vmatpush1.bf16.msra.mxu0 0
      %1096 = vmatprep.subr.bf16.mxu0 0
      %1097 = vmatpush1.bf16.msra.mxu0 0
      %1098 = vmatprep.subr.bf16.mxu0 0
      %1099 = vmatpush1.bf16.msra.mxu0 0
      %1100 = vmatprep.subr.bf16.mxu0 0
      %1101 = vmatpush1.bf16.msra.mxu0 0
      %1102 = vmatprep.mubr.bf16.mxu0 0
      %1103 = vmatmul.mubr.bf16.gmra.mrb[0].mxu0 %v1062
      %v1104 = vpop.f32.mrb[0].mxu0
      %v1105 = vadd.f32 0.0, %v1104
      %v1106 = vpop.f32.mrb[0].mxu0
      %v1107 = vadd.f32 0.0, %v1106
      %v1108 = vpop.f32.mrb[0].mxu0
      %v1109 = vpop.f32.mrb[0].mxu0
      %1110 = vdwg.mxu0
      %v1111 = vadd.f32 %v1023, %v1105
      %v1112 = vadd.f32 %v1024, %v1107
      %v1113 = vld [vmem:[%s450] sm:$0x3f]
      %s1114 = scalar_lea.vmem %s3, 14
      %v1115 = vld [vmem:[%s1114] sm:$0x3]
      %v1117 = vcombine.high %v1113, %v1113
      %v1119 = vunpack.c.l.s4 1983009808
      %v1120 = vunpack.c.0.s8 %v1119
      %v1121 = vlaneseq
      %v1122 = vshrl.u32 %v1121, 7
      %v1123 = vsub.s32 %v1120, %v1122
      %v1124 = vrot.slane %v1113, %v1123
      %v1126 = vunpack.c.l.s4 1983009808
      %v1127 = vunpack.c.0.s8 %v1126
      %v1128 = vlaneseq
      %v1129 = vshrl.u32 %v1128, 7
      %v1130 = vsub.s32 %v1127, %v1129
      %v1131 = vrot.slane %v1117, %v1130
      %v1132 = vcombine.high %v1124, %v1124
      %1133 = vrot.lane.b32.xlu0 %v1124, 95
      %v1134 = vpop.permute.xlu0 %1133
      %1135 = vrot.lane.b32.xlu0 %v1132, 95
      %v1136 = vpop.permute.xlu0 %1135
      %1137 = vrot.lane.b32.xlu0 %v1131, 95
      %v1138 = vpop.permute.xlu0 %1137
      %vm1139 = vcmask 777216
      %v1140 = vsel %vm1139, %v1134, %v1136
      %v1141 = vsel %vm1139, %v1136, %v1138
      %v1143 = vsel %vm542, %v1115, 0
      %v1146 = vand.u32 %v1140, %v549
      %v1149 = vand.u32 %v1141, %v549
      %1151 = vmatprep.subr.bf16.mxu0 %v1149
      %1152 = vmatpush1.bf16.msra.mxu0 %v1146
      %1153 = vmatprep.subr.bf16.mxu0 0
      %1154 = vmatpush1.bf16.msra.mxu0 0
      %1155 = vmatprep.subr.bf16.mxu0 0
      %1156 = vmatpush1.bf16.msra.mxu0 0
      %1157 = vmatprep.subr.bf16.mxu0 0
      %1158 = vmatpush1.bf16.msra.mxu0 0
      %1159 = vmatprep.subr.bf16.mxu0 0
      %1160 = vmatpush1.bf16.msra.mxu0 0
      %1161 = vmatprep.subr.bf16.mxu0 0
      %1162 = vmatpush1.bf16.msra.mxu0 0
      %1163 = vmatprep.subr.bf16.mxu0 0
      %1164 = vmatpush1.bf16.msra.mxu0 0
      %1165 = vmatprep.subr.bf16.mxu0 0
      %1166 = vmatpush1.bf16.msra.mxu0 0
      %1167 = vmatprep.subr.bf16.mxu0 0
      %1168 = vmatpush1.bf16.msra.mxu0 0
      %1169 = vmatprep.subr.bf16.mxu0 0
      %1170 = vmatpush1.bf16.msra.mxu0 0
      %1171 = vmatprep.subr.bf16.mxu0 0
      %1172 = vmatpush1.bf16.msra.mxu0 0
      %1173 = vmatprep.subr.bf16.mxu0 0
      %1174 = vmatpush1.bf16.msra.mxu0 0
      %1175 = vmatprep.subr.bf16.mxu0 0
      %1176 = vmatpush1.bf16.msra.mxu0 0
      %1177 = vmatprep.subr.bf16.mxu0 0
      %1178 = vmatpush1.bf16.msra.mxu0 0
      %1179 = vmatprep.subr.bf16.mxu0 0
      %1180 = vmatpush1.bf16.msra.mxu0 0
      %1181 = vmatprep.subr.bf16.mxu0 0
      %1182 = vmatpush1.bf16.msra.mxu0 0
      %1183 = vmatprep.mubr.bf16.mxu0 0
      %1184 = vmatmul.mubr.bf16.gmra.mrb[0].mxu0 %v1143
      %v1185 = vpop.f32.mrb[0].mxu0
      %v1186 = vadd.f32 0.0, %v1185
      %v1187 = vpop.f32.mrb[0].mxu0
      %v1188 = vadd.f32 0.0, %v1187
      %v1189 = vpop.f32.mrb[0].mxu0
      %v1190 = vpop.f32.mrb[0].mxu0
      %1191 = vdwg.mxu0
      %v1192 = vadd.f32 %v1111, %v1186
      %v1193 = vadd.f32 %v1112, %v1188
      %v1194 = vld [vmem:[%s450] sm:$0x3f]
      %1195 = vrot.lane.b32.xlu0 %v680, 34
      %v1196 = vpop.permute.xlu0 %1195
      %v1197 = vrot.slane %v1196, 6
      %vm1198 = vcmask 277504
      %v1199 = vsel %vm1198, %v1197, %v1196
      %v1201 = vmul.bf16 %v1194, %v1199
      %s1202 = scalar_lea.vmem %s3, 16
      %v1203 = vld [vmem:[%s1202] sm:$0x3]
      %v1205 = vcombine.high %v1201, %v1201
      %v1207 = vunpack.c.l.s4 1983009808
      %v1208 = vunpack.c.0.s8 %v1207
      %v1209 = vlaneseq
      %v1210 = vshrl.u32 %v1209, 7
      %v1211 = vsub.s32 %v1208, %v1210
      %v1212 = vrot.slane %v1201, %v1211
      %v1214 = vunpack.c.l.s4 1983009808
      %v1215 = vunpack.c.0.s8 %v1214
      %v1216 = vlaneseq
      %v1217 = vshrl.u32 %v1216, 7
      %v1218 = vsub.s32 %v1215, %v1217
      %v1219 = vrot.slane %v1205, %v1218
      %v1220 = vcombine.high %v1212, %v1212
      %1221 = vrot.lane.b32.xlu0 %v1212, 94
      %v1222 = vpop.permute.xlu0 %1221
      %1223 = vrot.lane.b32.xlu0 %v1220, 94
      %v1224 = vpop.permute.xlu0 %1223
      %1225 = vrot.lane.b32.xlu0 %v1219, 94
      %v1226 = vpop.permute.xlu0 %1225
      %vm1227 = vcmask 769024
      %v1228 = vsel %vm1227, %v1222, %v1224
      %v1229 = vsel %vm1227, %v1224, %v1226
      %v1231 = vsel %vm542, %v1203, 0
      %v1234 = vand.u32 %v1228, %v549
      %v1237 = vand.u32 %v1229, %v549
      %1239 = vmatprep.subr.bf16.mxu0 %v1237
      %1240 = vmatpush1.bf16.msra.mxu0 %v1234
      %1241 = vmatprep.subr.bf16.mxu0 0
      %1242 = vmatpush1.bf16.msra.mxu0 0
      %1243 = vmatprep.subr.bf16.mxu0 0
      %1244 = vmatpush1.bf16.msra.mxu0 0
      %1245 = vmatprep.subr.bf16.mxu0 0
      %1246 = vmatpush1.bf16.msra.mxu0 0
      %1247 = vmatprep.subr.bf16.mxu0 0
      %1248 = vmatpush1.bf16.msra.mxu0 0
      %1249 = vmatprep.subr.bf16.mxu0 0
      %1250 = vmatpush1.bf16.msra.mxu0 0
      %1251 = vmatprep.subr.bf16.mxu0 0
      %1252 = vmatpush1.bf16.msra.mxu0 0
      %1253 = vmatprep.subr.bf16.mxu0 0
      %1254 = vmatpush1.bf16.msra.mxu0 0
      %1255 = vmatprep.subr.bf16.mxu0 0
      %1256 = vmatpush1.bf16.msra.mxu0 0
      %1257 = vmatprep.subr.bf16.mxu0 0
      %1258 = vmatpush1.bf16.msra.mxu0 0
      %1259 = vmatprep.subr.bf16.mxu0 0
      %1260 = vmatpush1.bf16.msra.mxu0 0
      %1261 = vmatprep.subr.bf16.mxu0 0
      %1262 = vmatpush1.bf16.msra.mxu0 0
      %1263 = vmatprep.subr.bf16.mxu0 0
      %1264 = vmatpush1.bf16.msra.mxu0 0
      %1265 = vmatprep.subr.bf16.mxu0 0
      %1266 = vmatpush1.bf16.msra.mxu0 0
      %1267 = vmatprep.subr.bf16.mxu0 0
      %1268 = vmatpush1.bf16.msra.mxu0 0
      %1269 = vmatprep.subr.bf16.mxu0 0
      %1270 = vmatpush1.bf16.msra.mxu0 0
      %1271 = vmatprep.mubr.bf16.mxu0 0
      %1272 = vmatmul.mubr.bf16.gmra.mrb[0].mxu0 %v1231
      %v1273 = vpop.f32.mrb[0].mxu0
      %v1274 = vadd.f32 0.0, %v1273
      %v1275 = vpop.f32.mrb[0].mxu0
      %v1276 = vadd.f32 0.0, %v1275
      %v1277 = vpop.f32.mrb[0].mxu0
      %v1278 = vpop.f32.mrb[0].mxu0
      %1279 = vdwg.mxu0
      %v1280 = vadd.f32 %v1192, %v1274
      %v1281 = vadd.f32 %v1193, %v1276
      %v1282 = vld [vmem:[%s4] sm:$0xf]
      %1284 = vset.pattern.permute.xlu0 0
      %1285 = vperm.xlu0 %1284, %v1282
      %v1286 = vpop.permute.xlu0 %1285
      %v1288 = vadd.f32 %v1280, %v1286
      %v1289 = vadd.f32 %v1281, %v1286
      %vm1290 = vcmask 1043456
      %v1291 = vsel %vm1290, %v1288, 0.0
      %v1292 = vsel %vm1290, %v1289, 0.0
      %v1293 = vadd.f32 %v1291, %v1292
      %1294 = vadd.xlane.f32.xlu0 %v1293
      %v1295 = vpop.xlane.xlu0 %1294
      %v1296 = vmul.f32 %v1288, %v1288
      %v1297 = vmul.f32 %v1289, %v1289
      %v1298 = vsel %vm1290, %v1296, 0.0
      %v1299 = vsel %vm1290, %v1297, 0.0
      %v1300 = vadd.f32 %v1298, %v1299
      %1301 = vadd.xlane.f32.xlu0 %v1300
      %v1302 = vpop.xlane.xlu0 %1301
      %v1303 = vld [vmem:[%s7] sm:$0xf]
      %vm1304 = vcmask 31744
      %v1306 = vsel %vm1304, %v1303, 0
      %v1309 = vsel %vm1290, %v1295, 0
      %1311 = vmatprep.subr.mxu0 0.0
      %1312 = vmatpush1.msra.mxu0 %v1309
      %1313 = vmatprep.subr.mxu0 0.0
      %1314 = vmatpush1.msra.mxu0 0.0
      %1315 = vmatprep.subr.mxu0 0.0
      %1316 = vmatpush1.msra.mxu0 0.0
      %1317 = vmatprep.subr.mxu0 0.0
      %1318 = vmatpush1.msra.mxu0 0.0
      %1319 = vmatprep.subr.mxu0 0.0
      %1320 = vmatpush1.msra.mxu0 0.0
      %1321 = vmatprep.subr.mxu0 0.0
      %1322 = vmatpush1.msra.mxu0 0.0
      %1323 = vmatprep.subr.mxu0 0.0
      %1324 = vmatpush1.msra.mxu0 0.0
      %1325 = vmatprep.subr.mxu0 0.0
      %1326 = vmatpush1.msra.mxu0 0.0
      %1327 = vmatprep.subr.mxu0 0.0
      %1328 = vmatpush1.msra.mxu0 0.0
      %1329 = vmatprep.subr.mxu0 0.0
      %1330 = vmatpush1.msra.mxu0 0.0
      %1331 = vmatprep.subr.mxu0 0.0
      %1332 = vmatpush1.msra.mxu0 0.0
      %1333 = vmatprep.subr.mxu0 0.0
      %1334 = vmatpush1.msra.mxu0 0.0
      %1335 = vmatprep.subr.mxu0 0.0
      %1336 = vmatpush1.msra.mxu0 0.0
      %1337 = vmatprep.subr.mxu0 0.0
      %1338 = vmatpush1.msra.mxu0 0.0
      %1339 = vmatprep.subr.mxu0 0.0
      %1340 = vmatpush1.msra.mxu0 0.0
      %1341 = vmatprep.subr.mxu0 0.0
      %1342 = vmatpush1.msra.mxu0 0.0
      %1343 = vmatprep.subr.mxu0 0.0
      %1344 = vmatpush1.msra.mxu0 0.0
      %1345 = vmatprep.subr.mxu0 0.0
      %1346 = vmatpush1.msra.mxu0 0.0
      %1347 = vmatprep.subr.mxu0 0.0
      %1348 = vmatpush1.msra.mxu0 0.0
      %1349 = vmatprep.subr.mxu0 0.0
      %1350 = vmatpush1.msra.mxu0 0.0
      %1351 = vmatprep.subr.mxu0 0.0
      %1352 = vmatpush1.msra.mxu0 0.0
      %1353 = vmatprep.subr.mxu0 0.0
      %1354 = vmatpush1.msra.mxu0 0.0
      %1355 = vmatprep.subr.mxu0 0.0
      %1356 = vmatpush1.msra.mxu0 0.0
      %1357 = vmatprep.subr.mxu0 0.0
      %1358 = vmatpush1.msra.mxu0 0.0
      %1359 = vmatprep.subr.mxu0 0.0
      %1360 = vmatpush1.msra.mxu0 0.0
      %1361 = vmatprep.subr.mxu0 0.0
      %1362 = vmatpush1.msra.mxu0 0.0
      %1363 = vmatprep.subr.mxu0 0.0
      %1364 = vmatpush1.msra.mxu0 0.0
      %1365 = vmatprep.subr.mxu0 0.0
      %1366 = vmatpush1.msra.mxu0 0.0
      %1367 = vmatprep.subr.mxu0 0.0
      %1368 = vmatpush1.msra.mxu0 0.0
      %1369 = vmatprep.subr.mxu0 0.0
      %1370 = vmatpush1.msra.mxu0 0.0
      %1371 = vmatprep.subr.mxu0 0.0
      %1372 = vmatpush1.msra.mxu0 0.0
      %1373 = vmatprep.subr.mxu0 0.0
      %1374 = vmatpush1.msra.mxu0 0.0
      %1375 = vmatprep.mubr.f32.mxu0 0.0
      %1376 = vmatmul.mubr.f32.gmra.mrb[0].mxu0 %v1306
      %v1377 = vpop.f32.mrb[0].mxu0
      %v1378 = vadd.f32 0.0, %v1377
      %v1379 = vpop.f32.mrb[0].mxu0
      %1380 = vdwg.mxu0
      %v1381 = vmul.f32 %v1378, 0.0009765625
      %v1383 = vsel %vm1290, %v1302, 0
      %1385 = vmatprep.subr.mxu0 0.0
      %1386 = vmatpush1.msra.mxu0 %v1383
      %1387 = vmatprep.subr.mxu0 0.0
      %1388 = vmatpush1.msra.mxu0 0.0
      %1389 = vmatprep.subr.mxu0 0.0
      %1390 = vmatpush1.msra.mxu0 0.0
      %1391 = vmatprep.subr.mxu0 0.0
      %1392 = vmatpush1.msra.mxu0 0.0
      %1393 = vmatprep.subr.mxu0 0.0
      %1394 = vmatpush1.msra.mxu0 0.0
      %1395 = vmatprep.subr.mxu0 0.0
      %1396 = vmatpush1.msra.mxu0 0.0
      %1397 = vmatprep.subr.mxu0 0.0
      %1398 = vmatpush1.msra.mxu0 0.0
      %1399 = vmatprep.subr.mxu0 0.0
      %1400 = vmatpush1.msra.mxu0 0.0
      %1401 = vmatprep.subr.mxu0 0.0
      %1402 = vmatpush1.msra.mxu0 0.0
      %1403 = vmatprep.subr.mxu0 0.0
      %1404 = vmatpush1.msra.mxu0 0.0
      %1405 = vmatprep.subr.mxu0 0.0
      %1406 = vmatpush1.msra.mxu0 0.0
      %1407 = vmatprep.subr.mxu0 0.0
      %1408 = vmatpush1.msra.mxu0 0.0
      %1409 = vmatprep.subr.mxu0 0.0
      %1410 = vmatpush1.msra.mxu0 0.0
      %1411 = vmatprep.subr.mxu0 0.0
      %1412 = vmatpush1.msra.mxu0 0.0
      %1413 = vmatprep.subr.mxu0 0.0
      %1414 = vmatpush1.msra.mxu0 0.0
      %1415 = vmatprep.subr.mxu0 0.0
      %1416 = vmatpush1.msra.mxu0 0.0
      %1417 = vmatprep.subr.mxu0 0.0
      %1418 = vmatpush1.msra.mxu0 0.0
      %1419 = vmatprep.subr.mxu0 0.0
      %1420 = vmatpush1.msra.mxu0 0.0
      %1421 = vmatprep.subr.mxu0 0.0
      %1422 = vmatpush1.msra.mxu0 0.0
      %1423 = vmatprep.subr.mxu0 0.0
      %1424 = vmatpush1.msra.mxu0 0.0
      %1425 = vmatprep.subr.mxu0 0.0
      %1426 = vmatpush1.msra.mxu0 0.0
      %1427 = vmatprep.subr.mxu0 0.0
      %1428 = vmatpush1.msra.mxu0 0.0
      %1429 = vmatprep.subr.mxu0 0.0
      %1430 = vmatpush1.msra.mxu0 0.0
      %1431 = vmatprep.subr.mxu0 0.0
      %1432 = vmatpush1.msra.mxu0 0.0
      %1433 = vmatprep.subr.mxu0 0.0
      %1434 = vmatpush1.msra.mxu0 0.0
      %1435 = vmatprep.subr.mxu0 0.0
      %1436 = vmatpush1.msra.mxu0 0.0
      %1437 = vmatprep.subr.mxu0 0.0
      %1438 = vmatpush1.msra.mxu0 0.0
      %1439 = vmatprep.subr.mxu0 0.0
      %1440 = vmatpush1.msra.mxu0 0.0
      %1441 = vmatprep.subr.mxu0 0.0
      %1442 = vmatpush1.msra.mxu0 0.0
      %1443 = vmatprep.subr.mxu0 0.0
      %1444 = vmatpush1.msra.mxu0 0.0
      %1445 = vmatprep.subr.mxu0 0.0
      %1446 = vmatpush1.msra.mxu0 0.0
      %1447 = vmatprep.subr.mxu0 0.0
      %1448 = vmatpush1.msra.mxu0 0.0
      %1449 = vmatprep.mubr.f32.mxu0 0.0
      %1450 = vmatmul.mubr.f32.gmra.mrb[0].mxu0 %v1306
      %v1451 = vpop.f32.mrb[0].mxu0
      %v1452 = vadd.f32 0.0, %v1451
      %v1453 = vpop.f32.mrb[0].mxu0
      %1454 = vdwg.mxu0
      %v1455 = vmul.f32 %v1452, 0.0009765625
      %v1456 = vmul.f32 %v1381, %v1381
      %v1457 = vsub.f32 %v1455, %v1456
      %v1458 = vadd.f32 %v1457, 1e-05
      %v1459 = vrsqrt.pop %v1458
      %1461 = vset.pattern.permute.xlu0 0
      %1462 = vperm.xlu0 %1461, %v1381
      %v1463 = vpop.permute.xlu0 %1462
      %v1465 = vsub.f32 %v1288, %v1463
      %v1466 = vsub.f32 %v1289, %v1463
      %1468 = vset.pattern.permute.xlu0 0
      %1469 = vperm.xlu0 %1468, %v1459
      %v1470 = vpop.permute.xlu0 %1469
      %v1472 = vmul.f32 %v1465, %v1470
      %v1473 = vmul.f32 %v1466, %v1470
      %v1474 = vld [vmem:[%s5] sm:$0xf]
      %1476 = vset.pattern.permute.xlu0 0
      %1477 = vperm.xlu0 %1476, %v1474
      %v1478 = vpop.permute.xlu0 %1477
      %v1480 = vmul.f32 %v1472, %v1478
      %v1481 = vmul.f32 %v1473, %v1478
      %v1482 = vld [vmem:[%s6] sm:$0xf]
      %1484 = vset.pattern.permute.xlu0 0
      %1485 = vperm.xlu0 %1484, %v1482
      %v1486 = vpop.permute.xlu0 %1485
      %v1488 = vadd.f32 %v1480, %v1486
      %v1489 = vadd.f32 %v1481, %v1486
      %vm1490 = vcmp.gt.f32.partialorder %v1488, 0.0
      %vm1491 = vcmp.gt.f32.partialorder %v1489, 0.0
      %v1492 = vmul.f32 %v1488, 0.01
      %v1493 = vmul.f32 %v1489, 0.01
      %v1494 = vsel %vm1490, %v1488, %v1492
      %v1495 = vsel %vm1491, %v1489, %v1493
      %v1496 = vsel %vm1290, %v1494, 0.0
      %v1497 = vsel %vm1290, %v1495, 0.0
      %v1498 = vadd.f32 %v1496, %v1497
      %1499 = vadd.xlane.f32.xlu0 %v1498
      %v1500 = vpop.xlane.xlu0 %1499
      %v1501 = vrcp.pop 256.0
      %v1502 = vmul.f32 %v1500, %v1501
      %v1503 = vld [vmem:[%s9] sm:$0xf]
      %v1504 = vld [vmem:[%s455] sm:$0xff]
      %v1505 = vld [vmem:[%s455 + $0x8] sm:$0xff]
      %v1506 = vld [vmem:[%s10] sm:$0xf]
      %vm1507 = vcmask 130048
      %v1509 = vsel %vm1507, %v1503, 0
      %1511 = vmatprep.subr.mxu0 0.0
      %1512 = vmatpush1.msra.mxu0 %v1504
      %1513 = vmatprep.subr.mxu0 0.0
      %1514 = vmatpush1.msra.mxu0 %v1505
      %1515 = vmatprep.subr.mxu0 0.0
      %1516 = vmatpush1.msra.mxu0 0.0
      %1517 = vmatprep.subr.mxu0 0.0
      %1518 = vmatpush1.msra.mxu0 0.0
      %1519 = vmatprep.subr.mxu0 0.0
      %1520 = vmatpush1.msra.mxu0 0.0
      %1521 = vmatprep.subr.mxu0 0.0
      %1522 = vmatpush1.msra.mxu0 0.0
      %1523 = vmatprep.subr.mxu0 0.0
      %1524 = vmatpush1.msra.mxu0 0.0
      %1525 = vmatprep.subr.mxu0 0.0
      %1526 = vmatpush1.msra.mxu0 0.0
      %1527 = vmatprep.subr.mxu0 0.0
      %1528 = vmatpush1.msra.mxu0 0.0
      %1529 = vmatprep.subr.mxu0 0.0
      %1530 = vmatpush1.msra.mxu0 0.0
      %1531 = vmatprep.subr.mxu0 0.0
      %1532 = vmatpush1.msra.mxu0 0.0
      %1533 = vmatprep.subr.mxu0 0.0
      %1534 = vmatpush1.msra.mxu0 0.0
      %1535 = vmatprep.subr.mxu0 0.0
      %1536 = vmatpush1.msra.mxu0 0.0
      %1537 = vmatprep.subr.mxu0 0.0
      %1538 = vmatpush1.msra.mxu0 0.0
      %1539 = vmatprep.subr.mxu0 0.0
      %1540 = vmatpush1.msra.mxu0 0.0
      %1541 = vmatprep.subr.mxu0 0.0
      %1542 = vmatpush1.msra.mxu0 0.0
      %1543 = vmatprep.subr.mxu0 0.0
      %1544 = vmatpush1.msra.mxu0 0.0
      %1545 = vmatprep.subr.mxu0 0.0
      %1546 = vmatpush1.msra.mxu0 0.0
      %1547 = vmatprep.subr.mxu0 0.0
      %1548 = vmatpush1.msra.mxu0 0.0
      %1549 = vmatprep.subr.mxu0 0.0
      %1550 = vmatpush1.msra.mxu0 0.0
      %1551 = vmatprep.subr.mxu0 0.0
      %1552 = vmatpush1.msra.mxu0 0.0
      %1553 = vmatprep.subr.mxu0 0.0
      %1554 = vmatpush1.msra.mxu0 0.0
      %1555 = vmatprep.subr.mxu0 0.0
      %1556 = vmatpush1.msra.mxu0 0.0
      %1557 = vmatprep.subr.mxu0 0.0
      %1558 = vmatpush1.msra.mxu0 0.0
      %1559 = vmatprep.subr.mxu0 0.0
      %1560 = vmatpush1.msra.mxu0 0.0
      %1561 = vmatprep.subr.mxu0 0.0
      %1562 = vmatpush1.msra.mxu0 0.0
      %1563 = vmatprep.subr.mxu0 0.0
      %1564 = vmatpush1.msra.mxu0 0.0
      %1565 = vmatprep.subr.mxu0 0.0
      %1566 = vmatpush1.msra.mxu0 0.0
      %1567 = vmatprep.subr.mxu0 0.0
      %1568 = vmatpush1.msra.mxu0 0.0
      %1569 = vmatprep.subr.mxu0 0.0
      %1570 = vmatpush1.msra.mxu0 0.0
      %1571 = vmatprep.subr.mxu0 0.0
      %1572 = vmatpush1.msra.mxu0 0.0
      %1573 = vmatprep.subr.mxu0 0.0
      %1574 = vmatpush1.msra.mxu0 0.0
      %1575 = vmatprep.mubr.f32.mxu0 0.0
      %1576 = vmatmul.mubr.f32.gmra.mrb[0].mxu0 %v1509
      %v1577 = vpop.f32.mrb[0].mxu0
      %v1578 = vadd.f32 %v1506, %v1577
      %v1579 = vpop.f32.mrb[0].mxu0
      %1580 = vdwg.mxu0
      %v1581 = vadd.f32 %v1578, %v1502
      %vm1582 = vcmp.gt.f32.partialorder %v1581, 0.0
      %v1583 = vmul.f32 %v1581, 0.01
      %v1584 = vsel %vm1582, %v1581, %v1583
      %v1585 = vld [vmem:[%s11] sm:$0xf]
      %v1586 = vld [vmem:[%s12] sm:$0xf]
      %v1588 = vsel %vm1304, %v1585, 0
      %v1591 = vsel %vm1290, %v1584, 0
      %1593 = vmatprep.subr.mxu0 0.0
      %1594 = vmatpush1.msra.mxu0 %v1591
      %1595 = vmatprep.subr.mxu0 0.0
      %1596 = vmatpush1.msra.mxu0 0.0
      %1597 = vmatprep.subr.mxu0 0.0
      %1598 = vmatpush1.msra.mxu0 0.0
      %1599 = vmatprep.subr.mxu0 0.0
      %1600 = vmatpush1.msra.mxu0 0.0
      %1601 = vmatprep.subr.mxu0 0.0
      %1602 = vmatpush1.msra.mxu0 0.0
      %1603 = vmatprep.subr.mxu0 0.0
      %1604 = vmatpush1.msra.mxu0 0.0
      %1605 = vmatprep.subr.mxu0 0.0
      %1606 = vmatpush1.msra.mxu0 0.0
      %1607 = vmatprep.subr.mxu0 0.0
      %1608 = vmatpush1.msra.mxu0 0.0
      %1609 = vmatprep.subr.mxu0 0.0
      %1610 = vmatpush1.msra.mxu0 0.0
      %1611 = vmatprep.subr.mxu0 0.0
      %1612 = vmatpush1.msra.mxu0 0.0
      %1613 = vmatprep.subr.mxu0 0.0
      %1614 = vmatpush1.msra.mxu0 0.0
      %1615 = vmatprep.subr.mxu0 0.0
      %1616 = vmatpush1.msra.mxu0 0.0
      %1617 = vmatprep.subr.mxu0 0.0
      %1618 = vmatpush1.msra.mxu0 0.0
      %1619 = vmatprep.subr.mxu0 0.0
      %1620 = vmatpush1.msra.mxu0 0.0
      %1621 = vmatprep.subr.mxu0 0.0
      %1622 = vmatpush1.msra.mxu0 0.0
      %1623 = vmatprep.subr.mxu0 0.0
      %1624 = vmatpush1.msra.mxu0 0.0
      %1625 = vmatprep.subr.mxu0 0.0
      %1626 = vmatpush1.msra.mxu0 0.0
      %1627 = vmatprep.subr.mxu0 0.0
      %1628 = vmatpush1.msra.mxu0 0.0
      %1629 = vmatprep.subr.mxu0 0.0
      %1630 = vmatpush1.msra.mxu0 0.0
      %1631 = vmatprep.subr.mxu0 0.0
      %1632 = vmatpush1.msra.mxu0 0.0
      %1633 = vmatprep.subr.mxu0 0.0
      %1634 = vmatpush1.msra.mxu0 0.0
      %1635 = vmatprep.subr.mxu0 0.0
      %1636 = vmatpush1.msra.mxu0 0.0
      %1637 = vmatprep.subr.mxu0 0.0
      %1638 = vmatpush1.msra.mxu0 0.0
      %1639 = vmatprep.subr.mxu0 0.0
      %1640 = vmatpush1.msra.mxu0 0.0
      %1641 = vmatprep.subr.mxu0 0.0
      %1642 = vmatpush1.msra.mxu0 0.0
      %1643 = vmatprep.subr.mxu0 0.0
      %1644 = vmatpush1.msra.mxu0 0.0
      %1645 = vmatprep.subr.mxu0 0.0
      %1646 = vmatpush1.msra.mxu0 0.0
      %1647 = vmatprep.subr.mxu0 0.0
      %1648 = vmatpush1.msra.mxu0 0.0
      %1649 = vmatprep.subr.mxu0 0.0
      %1650 = vmatpush1.msra.mxu0 0.0
      %1651 = vmatprep.subr.mxu0 0.0
      %1652 = vmatpush1.msra.mxu0 0.0
      %1653 = vmatprep.subr.mxu0 0.0
      %1654 = vmatpush1.msra.mxu0 0.0
      %1655 = vmatprep.subr.mxu0 0.0
      %1656 = vmatpush1.msra.mxu0 0.0
      %1657 = vmatprep.mubr.f32.mxu0 0.0
      %1658 = vmatmul.mubr.f32.gmra.mrb[0].mxu0 %v1588
      %v1659 = vpop.f32.mrb[0].mxu0
      %v1660 = vadd.f32 %v1586, %v1659
      %v1661 = vpop.f32.mrb[0].mxu0
      %1662 = vdwg.mxu0
      %s1663 = sld [smem:[#allocation2]]
      %v1664 = vstv %s1663
      %v1665 = vmul.f32 %v1660, %v1664
      %vm1666 = vcmask 3072
      %v1667 = vsel %vm1666, %v1665, -inf
      %v1668 = vrot.slane %v1667, 4
      %v1669 = vmax.f32 %v1667, %v1668
      %v1670 = vrot.slane %v1669, 2
      %v1671 = vmax.f32 %v1669, %v1670
      %v1672 = vrot.slane %v1671, 1
      %v1673 = vmax.f32 %v1671, %v1672
      %v1674 = vsub.f32 %v1665, %v1673
      %v1675 = vmul.f32 %v1674, 1.442695
      %v1676 = vpow.pop %v1675
      %v1677 = vsel %vm1666, %v1676, 0.0
      %v1678 = vrot.slane %v1677, 4
      %v1679 = vadd.f32 %v1677, %v1678
      %v1680 = vrot.slane %v1679, 2
      %v1681 = vadd.f32 %v1679, %v1680
      %v1682 = vrot.slane %v1681, 1
      %v1683 = vadd.f32 %v1681, %v1682
      %v1684 = vrcp.pop %v1683
      %v1685 = vmul.f32 %v1676, %v1684
      %1686 = vst.msk [vmem:[%s459] sm:$0xf] %vm1666, %v1685
      %p1687 = scmp.lt.s32.totalorder %s25, 1
      %s1688 = scalar_select %p1687, %s25, 1
      %s1689 = smul.addr %s1688, 4
      %s1690 = scalar_lea.vmem %s13, %s1689
      // Predicated region
      $region73: #{tpu_custom_call.1} parent=71 // pred_check
        %p1691 = pneg %p326
      $region74: #{tpu_custom_call.1} parent=71 // pred_check_branch
        %1693 = sbr.rel (%p1691) target = $region76
      $region75: #{tpu_custom_call.1} parent=71 // pred_region
        _
      $region76: #{tpu_custom_call.1} parent=71 // pred_fallthru
        _
    $region72: #{tpu_custom_call.1} parent=5 // pred_fallthru
      _
    %p1694 = scmp.le.s32.totalorder 2, %s20
    // Predicated region
    $region77: #{tpu_custom_call.1} parent=5 // pred_check
      %p1695 = pneg %p1694
    $region78: #{tpu_custom_call.1} parent=5 // pred_check_branch
      %1697 = sbr.rel (%p1695) target = $region80
    $region79: #{tpu_custom_call.1} parent=5 // pred_region
      %s1698 = ssub.s32 %s20, 2
      // Predicated region
      $region81: #{tpu_custom_call.1} parent=79 // pred_check
        %p1699 = pneg %p332
      $region82: #{tpu_custom_call.1} parent=79 // pred_check_branch
        %1701 = sbr.rel (%p1699) target = $region84
      $region83: #{tpu_custom_call.1} parent=79 // pred_region
        %p1702 = scmp.lt.s32.totalorder %s26, 1
        %s1703 = scalar_select %p1702, %s26, 1
        %s1704 = smul.addr %s1703, 4
        %s1705 = scalar_lea.vmem %s13, %s1704
      $region84: #{tpu_custom_call.1} parent=79 // pred_fallthru
        _
    $region80: #{tpu_custom_call.1} parent=5 // pred_fallthru
      _
  $region6: #{tpu_custom_call.1} parent=0 // loop_footer
    %s24 = sadd.s32 1, %s20
  $region7: #{tpu_custom_call.1} parent=0 // loop_footer_branch
    %19 = sbr.rel target = $region3
  $region8: #{tpu_custom_call.1} parent=0 // loop_exit
    _

</llo_original>
